<compile_context>
chip_gen: v7x
topology: tpu7x:2x2x1
jax: 0.10.0
libtpu: 0.0.40
codegen_flags: <defaults>
</compile_context>

<pallas_src>
import functools

import jax
import jax.numpy as jnp
from jax.experimental import pallas as pl
from jax.experimental.pallas import tpu as pltpu


# Reduced EfficientNet-style config (stand-in for the real backbone).
C_IN, C_STEM, C_EXP, C_SE, C_PROJ, C_HEAD, OUT_DIM = 3, 16, 64, 4, 16, 32, 5
LANE = 128                       # every channel dim padded to one full lane group
TAPS = 9 * C_IN                  # 3x3 stem taps folded into one contraction dim

assert C_STEM == C_PROJ, "MBConv residual requires matching channels"
assert C_EXP + C_STEM <= LANE, "residual must fit in the pad lanes of the dw output"


def _vmem_limit_bytes():
    """Generation-aware scoped-VMEM budget (v5e/v6e ~96 MiB, v7x ~48 MiB)."""
    cap = 64 * 1024 * 1024            # conservative default: assume v7x-sized VMEM
    try:
        info = pltpu.get_tpu_info()
        for name in ("vmem_capacity_bytes", "vmem_size_bytes", "vmem_bytes"):
            val = getattr(info, name, None)
            if val:
                cap = int(val)
                break
    except Exception:
        pass
    return max(32 * 1024 * 1024, min(cap * 3 // 4, 100 * 1024 * 1024))


VMEM_LIMIT = _vmem_limit_bytes()


def _swish(x):
    return x * jax.nn.sigmoid(x)


# ---------------------------------------------------------------------------
# Kernel 1: stem 3x3/s2 (single K=27 dot) + expand 1x1 + depthwise 3x3 + SE
#           (squeeze + MLP -> excite gate); stem residual packed into pad lanes.
# ---------------------------------------------------------------------------


def _backbone_kernel(taps_ref, sw_ref, sb_ref, ew_ref, eb_ref, dw_ref, db_ref,
                     s1w_ref, s1b_ref, s2w_ref, s2b_ref,
                     z_ref, gate_ref, *, ho, wo):
    m = ho * wo
    taps = taps_ref[0]                                     # (m, 27) bf16

    # Stem conv 3x3 stride-2: taps folded into the contraction dim -> one lane-dense
    # MXU dot (+ folded-BN bias + swish).  Pad lanes stay exactly zero.
    h = _swish(jnp.dot(taps, sw_ref[...],
                       preferred_element_type=jnp.float32) + sb_ref[...])   # (m, 128)

    # MBConv expand 1x1 + swish.
    e = _swish(jnp.dot(h.astype(jnp.bfloat16), ew_ref[...],
                       preferred_element_type=jnp.float32) + eb_ref[...])   # (m, 128)

    # Depthwise 3x3, zero padded.  No (ho+2, wo+2) halo tensor: build the three
    # column-shifted views once and reuse them for the three row groups; the row
    # direction uses cheap leading-axis shifts (aligned whole-vreg-row copies).
    x = e.reshape(ho, wo, LANE)
    w = dw_ref[...]                                        # (9, 128) tap-major
    zc = jnp.zeros((ho, 1, LANE), jnp.float32)
    c_l = jnp.concatenate([zc, x[:, :-1, :]], axis=1)      # x[i, j-1] (0 at j=0)
    c_r = jnp.concatenate([x[:, 1:, :], zc], axis=1)       # x[i, j+1] (0 at j=wo-1)
    top = w[0] * c_l + w[1] * x + w[2] * c_r               # contributions from row i-1
    mid = w[3] * c_l + w[4] * x + w[5] * c_r               # contributions from row i
    bot = w[6] * c_l + w[7] * x + w[8] * c_r               # contributions from row i+1
    zr = jnp.zeros((1, wo, LANE), jnp.float32)
    acc = mid
    acc = acc + jnp.concatenate([zr, top[:-1]], axis=0)
    acc = acc + jnp.concatenate([bot[1:], zr], axis=0)
    e_dw = _swish(acc + db_ref[...]).reshape(m, LANE)      # (m, 128), lanes>=64 are 0

    # SE squeeze (spatial mean) + tiny SE MLP, all in-kernel -> excite gate.
    pooled = jnp.sum(e_dw, axis=0, keepdims=True) * (1.0 / m)               # (1, 128)
    s1 = _swish(jnp.dot(pooled, s1w_ref[...],
                        preferred_element_type=jnp.float32) + s1b_ref[...])
    s2 = jnp.dot(s1, s2w_ref[...],
                 preferred_element_type=jnp.float32) + s2b_ref[...]
    lane = jax.lax.broadcasted_iota(jnp.int32, (1, LANE), 1)
    # Gate is 1.0 on the pad lanes so the packed residual passes through K2 unscaled.
    gate_ref[...] = jnp.where(lane < C_EXP, jax.nn.sigmoid(s2), 1.0)[None]

    # Pack the stem residual (16 ch) into the otherwise-zero lanes [64:80) of the
    # depthwise output: a single lane-dense bf16 tensor carries both to K2 for free.
    z_ref[...] = (e_dw + pltpu.roll(h, shift=C_EXP, axis=1))[None].astype(z_ref.dtype)


def backbone(taps, p, n, ho, wo):
    hw = ho * wo
    kernel = functools.partial(_backbone_kernel, ho=ho, wo=wo)
    return pl.pallas_call(
        kernel,
        out_shape=(jax.ShapeDtypeStruct((n, hw, LANE), jnp.bfloat16),
                   jax.ShapeDtypeStruct((n, 1, LANE), jnp.float32)),
        grid=(n,),
        in_specs=[
            pl.BlockSpec((1, hw, TAPS), lambda i: (i, 0, 0)),
            pl.BlockSpec((TAPS, LANE), lambda i: (0, 0)),
            pl.BlockSpec((1, LANE), lambda i: (0, 0)),
            pl.BlockSpec((LANE, LANE), lambda i: (0, 0)),
            pl.BlockSpec((1, LANE), lambda i: (0, 0)),
            pl.BlockSpec((9, LANE), lambda i: (0, 0)),
            pl.BlockSpec((1, LANE), lambda i: (0, 0)),
            pl.BlockSpec((LANE, LANE), lambda i: (0, 0)),
            pl.BlockSpec((1, LANE), lambda i: (0, 0)),
            pl.BlockSpec((LANE, LANE), lambda i: (0, 0)),
            pl.BlockSpec((1, LANE), lambda i: (0, 0)),
        ],
        out_specs=(pl.BlockSpec((1, hw, LANE), lambda i: (i, 0, 0)),
                   pl.BlockSpec((1, 1, LANE), lambda i: (i, 0, 0))),
        compiler_params=pltpu.CompilerParams(
            dimension_semantics=("parallel",),
            vmem_limit_bytes=VMEM_LIMIT),
    )(taps, p["stem_w"], p["stem_b"], p["exp_w"], p["exp_b"],
      p["dw_w"], p["dw_b"], p["se1_w"], p["se1_b"], p["se2_w"], p["se2_b"])


# ---------------------------------------------------------------------------
# Kernel 2: SE excite * project-1x1 (+packed residual) + head-1x1 + swish + GAP + FC
# ---------------------------------------------------------------------------


def _head_fc_kernel(z_ref, g_ref, pw_ref, pb_ref, hcw_ref, hcb_ref,
                    fw_ref, fb_ref, o_ref, feat_acc, *, inv_hw):
    t = pl.program_id(1)

    @pl.when(t == 0)
    def _():
        feat_acc[...] = jnp.zeros_like(feat_acc)

    # SE excite; pad lanes of the gate are 1.0 so the packed residual is untouched.
    zt = z_ref[0].astype(jnp.float32) * g_ref[0]           # (thw, 128)
    # Project 1x1; the identity block in pw adds the packed residual inside the MXU.
    hres = jnp.dot(zt.astype(jnp.bfloat16), pw_ref[...],
                   preferred_element_type=jnp.float32) + pb_ref[...]
    # Head conv 1x1 + swish.
    f = _swish(jnp.dot(hres.astype(jnp.bfloat16), hcw_ref[...],
                       preferred_element_type=jnp.float32) + hcb_ref[...])
    feat_acc[...] += jnp.sum(f, axis=0, keepdims=True)

    @pl.when(t == pl.num_programs(1) - 1)
    def _():
        feat = feat_acc[...] * inv_hw                      # global average pool
        out = jnp.dot(feat.astype(jnp.bfloat16), fw_ref[...],
                      preferred_element_type=jnp.float32) + fb_ref[...]
        o_ref[...] = out[None].astype(o_ref.dtype)         # (1, 1, 128) lane-dense


def _pick_hw_tile(hw):
    for cand in (4096, 2048, 1024, 512, 256, 128, 64, 32, 16, 8):
        if cand <= hw and hw % cand == 0:
            return cand
    return hw


def head_fc(z, gate, p, n, hw):
    thw = _pick_hw_tile(hw)
    kernel = functools.partial(_head_fc_kernel, inv_hw=1.0 / hw)
    return pl.pallas_call(
        kernel,
        out_shape=jax.ShapeDtypeStruct((n, 1, LANE), jnp.float32),
        grid=(n, hw // thw),
        in_specs=[
            pl.BlockSpec((1, thw, LANE), lambda i, j: (i, j, 0)),
            pl.BlockSpec((1, 1, LANE), lambda i, j: (i, 0, 0)),
            pl.BlockSpec((LANE, LANE), lambda i, j: (0, 0)),
            pl.BlockSpec((1, LANE), lambda i, j: (0, 0)),
            pl.BlockSpec((LANE, LANE), lambda i, j: (0, 0)),
            pl.BlockSpec((1, LANE), lambda i, j: (0, 0)),
            pl.BlockSpec((LANE, LANE), lambda i, j: (0, 0)),
            pl.BlockSpec((1, LANE), lambda i, j: (0, 0)),
        ],
        out_specs=pl.BlockSpec((1, 1, LANE), lambda i, j: (i, 0, 0)),
        scratch_shapes=[pltpu.VMEM((1, LANE), jnp.float32)],
        compiler_params=pltpu.CompilerParams(
            dimension_semantics=("parallel", "arbitrary"),
            vmem_limit_bytes=VMEM_LIMIT),
    )(z, gate, p["proj_w"], p["proj_b"], p["head_w"], p["head_b"],
      p["fc_w"], p["fc_b"])


# ---------------------------------- params ---------------------------------


def init_params(key):
    ks = jax.random.split(key, 9)

    def dense(k, fan_in, shape):
        return jax.random.normal(k, shape, jnp.float32) / jnp.sqrt(jnp.float32(fan_in))

    def pad2(w, rows, cols):
        out = jnp.zeros((rows, cols), jnp.float32)
        return out.at[:w.shape[0], :w.shape[1]].set(w)

    p = {}
    # Stem conv 3x3/s2 (BN folded): taps folded into one 27-wide contraction dim.
    p["stem_w"] = pad2(dense(ks[0], TAPS, (TAPS, C_STEM)), TAPS, LANE).astype(jnp.bfloat16)
    p["stem_b"] = pad2(jnp.full((1, C_STEM), 0.01, jnp.float32), 1, LANE)
    # MBConv expand 1x1.
    p["exp_w"] = pad2(dense(ks[1], C_STEM, (C_STEM, C_EXP)), LANE, LANE).astype(jnp.bfloat16)
    p["exp_b"] = pad2(jnp.full((1, C_EXP), 0.01, jnp.float32), 1, LANE)
    # Depthwise 3x3 (VPU elementwise -> f32), layout (tap, channel).
    p["dw_w"] = pad2(dense(ks[2], 9, (9, C_EXP)), 9, LANE)
    p["dw_b"] = pad2(jnp.full((1, C_EXP), 0.01, jnp.float32), 1, LANE)
    # Squeeze-excite MLP (tiny; kept f32).
    p["se1_w"] = pad2(dense(ks[3], C_EXP, (C_EXP, C_SE)), LANE, LANE)
    p["se1_b"] = jnp.zeros((1, LANE), jnp.float32)
    p["se2_w"] = pad2(dense(ks[4], C_SE, (C_SE, C_EXP)), LANE, LANE)
    p["se2_b"] = jnp.zeros((1, LANE), jnp.float32)
    # Project 1x1, packed: rows [64:80) carry an identity so the stem residual that
    # K1 stored in those lanes of z is added inside the same MXU dot in K2.
    proj = pad2(dense(ks[5], C_EXP, (C_EXP, C_PROJ)), LANE, LANE)
    proj = proj.at[C_EXP:C_EXP + C_STEM, :C_PROJ].set(jnp.eye(C_STEM, C_PROJ))
    p["proj_w"] = proj.astype(jnp.bfloat16)
    p["proj_b"] = pad2(jnp.full((1, C_PROJ), 0.01, jnp.float32), 1, LANE)
    # Head conv 1x1.
    p["head_w"] = pad2(dense(ks[6], C_PROJ, (C_PROJ, C_HEAD)), LANE, LANE).astype(jnp.bfloat16)
    p["head_b"] = pad2(jnp.full((1, C_HEAD), 0.01, jnp.float32), 1, LANE)
    # self.myfc = nn.Linear(in_features, out_dim): padded to 128 lane-dense outputs,
    # sliced back to OUT_DIM in the wrapper.
    p["fc_w"] = pad2(dense(ks[7], C_HEAD, (C_HEAD, OUT_DIM)), LANE, LANE).astype(jnp.bfloat16)
    p["fc_b"] = pad2(dense(ks[8], C_HEAD, (1, OUT_DIM)), 1, LANE)
    return p


# --------------------------------- forward ---------------------------------


def _build_stem_taps(x_nhwc):
    """(N,H,W,Cin) -> (N, (H/2)*(W/2), 9*Cin): per-output-pixel 3x3/s2, pad=1 taps."""
    n, hgt, wdt, c = x_nhwc.shape
    ho, wo = hgt // 2, wdt // 2
    xp = jnp.pad(x_nhwc, ((0, 0), (1, 1), (1, 1), (0, 0)))
    taps = [xp[:, di:di + hgt:2, dj:dj + wdt:2, :]
            for di in range(3) for dj in range(3)]
    return jnp.concatenate(taps, axis=-1).reshape(n, ho * wo, 9 * c)


def enetv2_forward(params, x_nchw):
    # NCHW -> NHWC so channels/taps sit on the 128-lane axis inside the kernels.
    x = jnp.transpose(x_nchw, (0, 2, 3, 1)).astype(jnp.float32)
    n, hgt, wdt, _ = x.shape
    ho, wo = hgt // 2, wdt // 2
    hw = ho * wo

    # ---- self.enet(x): reduced EfficientNet feature extractor ----
    taps = _build_stem_taps(x).astype(jnp.bfloat16)        # (n, hw, 27)
    z, gate = backbone(taps, params, n, ho, wo)            # K1
    out = head_fc(z, gate, params, n, hw)                  # K2 (+ self.myfc)
    return out.reshape(n, LANE)[:, :OUT_DIM]               # (n, 5)


def reference_forward(params, x_nchw):
    """Plain-JAX reference (same bf16 matmul casts; no lane-packing tricks)."""
    x = jnp.transpose(x_nchw, (0, 2, 3, 1)).astype(jnp.float32)
    n, hgt, wdt, _ = x.shape
    ho, wo = hgt // 2, wdt // 2
    hw = ho * wo
    bf = jnp.bfloat16
    taps = _build_stem_taps(x).astype(bf)
    h = _swish(jnp.dot(taps, params["stem_w"],
                       preferred_element_type=jnp.float32) + params["stem_b"])
    e = _swish(jnp.dot(h.astype(bf), params["exp_w"],
                       preferred_element_type=jnp.float32) + params["exp_b"])
    e = e.reshape(n, ho, wo, LANE)
    ep = jnp.pad(e, ((0, 0), (1, 1), (1, 1), (0, 0)))
    acc = jnp.zeros_like(e)
    for di in range(3):
        for dj in range(3):
            acc = acc + ep[:, di:di + ho, dj:dj + wo, :] * params["dw_w"][di * 3 + dj]
    e_dw = _swish(acc + params["dw_b"])
    pooled = jnp.mean(e_dw, axis=(1, 2))
    s1 = _swish(pooled @ params["se1_w"] + params["se1_b"])
    g = jax.nn.sigmoid(s1 @ params["se2_w"] + params["se2_b"])
    gated = e_dw.reshape(n, hw, LANE) * g[:, None, :]
    proj = jnp.dot(gated.astype(bf), params["proj_w"],
                   preferred_element_type=jnp.float32) + params["proj_b"]
    hres = proj + h                                        # MBConv residual
    f = _swish(jnp.dot(hres.astype(bf), params["head_w"],
                       preferred_element_type=jnp.float32) + params["head_b"])
    feat = jnp.mean(f, axis=1)
    out = jnp.dot(feat.astype(bf), params["fc_w"],
                  preferred_element_type=jnp.float32) + params["fc_b"]
    return out[:, :OUT_DIM]


if __name__ == "__main__":
    root = jax.random.PRNGKey(0)
    k_params, k_input = jax.random.split(root)
    params = init_params(k_params)
    x = jax.random.normal(k_input, (2, C_IN, 16, 16), jnp.float32)   # NCHW

    fwd = jax.jit(enetv2_forward)
    out = fwd(params, x)
    jax.block_until_ready(out)

    assert out.shape == (2, OUT_DIM), out.shape
    assert out.dtype == jnp.float32
    assert bool(jnp.all(jnp.isfinite(out)))

    # Self-check vs. a plain-JAX reference (bf16 matmuls => ~1e-2-level tolerance).
    ref = jax.jit(reference_forward)(params, x)
    jax.block_until_ready(ref)
    err = float(jnp.max(jnp.abs(out - ref)))
    assert err < 5e-2, f"kernel vs reference mismatch: {err}"
    print("KERNEL_OK")
</pallas_src>

<mosaic_0001>
module attributes {stable_mosaic.version = 11 : i64} {
  func.func @_backbone_kernel(%arg0: i32, %arg1: memref<1x64x27xbf16, #tpu.memory_space<vmem>>, %arg2: memref<27x128xbf16, #tpu.memory_space<vmem>>, %arg3: memref<1x128xf32, #tpu.memory_space<vmem>>, %arg4: memref<128x128xbf16, #tpu.memory_space<vmem>>, %arg5: memref<1x128xf32, #tpu.memory_space<vmem>>, %arg6: memref<9x128xf32, #tpu.memory_space<vmem>>, %arg7: memref<1x128xf32, #tpu.memory_space<vmem>>, %arg8: memref<128x128xf32, #tpu.memory_space<vmem>>, %arg9: memref<1x128xf32, #tpu.memory_space<vmem>>, %arg10: memref<128x128xf32, #tpu.memory_space<vmem>>, %arg11: memref<1x128xf32, #tpu.memory_space<vmem>>, %arg12: memref<1x64x128xbf16, #tpu.memory_space<vmem>>, %arg13: memref<1x1x128xf32, #tpu.memory_space<vmem>>) attributes {dimension_semantics = [#tpu.dimension_semantics<parallel>], iteration_bounds = array<i64: 2>, scalar_prefetch = 0 : i64, scratch_operands = 0 : i64, tpu.core_type = #tpu.core_type<tc>, window_params = [{transform_indices = @transform_0, window_bounds = array<i64: 1, 64, 27>}, {pipeline_mode = #tpu.pipeline_mode<synchronous>, transform_indices = @transform_1, window_bounds = array<i64: 27, 128>}, {pipeline_mode = #tpu.pipeline_mode<synchronous>, transform_indices = @transform_2, window_bounds = array<i64: 1, 128>}, {pipeline_mode = #tpu.pipeline_mode<synchronous>, transform_indices = @transform_3, window_bounds = array<i64: 128, 128>}, {pipeline_mode = #tpu.pipeline_mode<synchronous>, transform_indices = @transform_4, window_bounds = array<i64: 1, 128>}, {pipeline_mode = #tpu.pipeline_mode<synchronous>, transform_indices = @transform_5, window_bounds = array<i64: 9, 128>}, {pipeline_mode = #tpu.pipeline_mode<synchronous>, transform_indices = @transform_6, window_bounds = array<i64: 1, 128>}, {pipeline_mode = #tpu.pipeline_mode<synchronous>, transform_indices = @transform_7, window_bounds = array<i64: 128, 128>}, {pipeline_mode = #tpu.pipeline_mode<synchronous>, transform_indices = @transform_8, window_bounds = array<i64: 1, 128>}, {pipeline_mode = #tpu.pipeline_mode<synchronous>, transform_indices = @transform_9, window_bounds = array<i64: 128, 128>}, {pipeline_mode = #tpu.pipeline_mode<synchronous>, transform_indices = @transform_10, window_bounds = array<i64: 1, 128>}, {transform_indices = @transform_11, window_bounds = array<i64: 1, 64, 128>}, {transform_indices = @transform_12, window_bounds = array<i64: 1, 1, 128>}]} {
    %c0 = arith.constant 0 : index
    %c0_0 = arith.constant 0 : index
    %c0_1 = arith.constant 0 : index
    %0 = vector.load %arg1[%c0, %c0_0, %c0_1] : memref<1x64x27xbf16, #tpu.memory_space<vmem>>, vector<1x64x27xbf16>
    %1 = vector.shape_cast %0 : vector<1x64x27xbf16> to vector<64x27xbf16>
    %c0_2 = arith.constant 0 : index
    %c0_3 = arith.constant 0 : index
    %2 = vector.load %arg2[%c0_2, %c0_3] : memref<27x128xbf16, #tpu.memory_space<vmem>>, vector<27x128xbf16>
    %cst = arith.constant dense<0.000000e+00> : vector<64x128xf32>
    %3 = tpu.matmul %1, %2, %cst {dimension_numbers = #tpu.dot_dimension_numbers<[1], [0], [0], [1], [0, 0, 1, 1], [], []>} : vector<64x27xbf16>, vector<27x128xbf16>, vector<64x128xf32> -> vector<64x128xf32>
    %c0_4 = arith.constant 0 : index
    %c0_5 = arith.constant 0 : index
    %4 = vector.load %arg3[%c0_4, %c0_5] : memref<1x128xf32, #tpu.memory_space<vmem>>, vector<1x128xf32>
    %5 = vector.broadcast %4 : vector<1x128xf32> to vector<64x128xf32>
    %6 = arith.addf %3, %5 : vector<64x128xf32>
    %7 = arith.negf %6 : vector<64x128xf32>
    %8 = math.exp %7 : vector<64x128xf32>
    %cst_6 = arith.constant 1.000000e+00 : f32
    %9 = vector.broadcast %cst_6 : f32 to vector<64x128xf32>
    %10 = arith.addf %9, %8 : vector<64x128xf32>
    %11 = arith.divf %9, %10 : vector<64x128xf32>
    %12 = arith.mulf %6, %11 : vector<64x128xf32>
    %13 = arith.truncf %12 : vector<64x128xf32> to vector<64x128xbf16>
    %c0_7 = arith.constant 0 : index
    %c0_8 = arith.constant 0 : index
    %14 = vector.load %arg4[%c0_7, %c0_8] : memref<128x128xbf16, #tpu.memory_space<vmem>>, vector<128x128xbf16>
    %cst_9 = arith.constant dense<0.000000e+00> : vector<64x128xf32>
    %15 = tpu.matmul %13, %14, %cst_9 {dimension_numbers = #tpu.dot_dimension_numbers<[1], [0], [0], [1], [0, 0, 1, 1], [], []>} : vector<64x128xbf16>, vector<128x128xbf16>, vector<64x128xf32> -> vector<64x128xf32>
    %c0_10 = arith.constant 0 : index
    %c0_11 = arith.constant 0 : index
    %16 = vector.load %arg5[%c0_10, %c0_11] : memref<1x128xf32, #tpu.memory_space<vmem>>, vector<1x128xf32>
    %17 = vector.broadcast %16 : vector<1x128xf32> to vector<64x128xf32>
    %18 = arith.addf %15, %17 : vector<64x128xf32>
    %19 = arith.negf %18 : vector<64x128xf32>
    %20 = math.exp %19 : vector<64x128xf32>
    %cst_12 = arith.constant 1.000000e+00 : f32
    %21 = vector.broadcast %cst_12 : f32 to vector<64x128xf32>
    %22 = arith.addf %21, %20 : vector<64x128xf32>
    %23 = arith.divf %21, %22 : vector<64x128xf32>
    %24 = arith.mulf %18, %23 : vector<64x128xf32>
    %25 = vector.shape_cast %24 : vector<64x128xf32> to vector<8x8x128xf32>
    %c0_13 = arith.constant 0 : index
    %c0_14 = arith.constant 0 : index
    %26 = vector.load %arg6[%c0_13, %c0_14] : memref<9x128xf32, #tpu.memory_space<vmem>>, vector<9x128xf32>
    %cst_15 = arith.constant 0.000000e+00 : f32
    %27 = vector.broadcast %cst_15 : f32 to vector<8x1x128xf32>
    %28 = vector.extract_strided_slice %25 {offsets = [0, 0, 0], sizes = [8, 7, 128], strides = [1, 1, 1]} : vector<8x8x128xf32> to vector<8x7x128xf32>
    %29 = tpu.concatenate %27, %28 in 1 : vector<8x1x128xf32>, vector<8x7x128xf32> -> vector<8x8x128xf32>
    %30 = vector.extract_strided_slice %25 {offsets = [0, 1, 0], sizes = [8, 7, 128], strides = [1, 1, 1]} : vector<8x8x128xf32> to vector<8x7x128xf32>
    %31 = tpu.concatenate %30, %27 in 1 : vector<8x7x128xf32>, vector<8x1x128xf32> -> vector<8x8x128xf32>
    %32 = vector.extract_strided_slice %26 {offsets = [0, 0], sizes = [1, 128], strides = [1, 1]} : vector<9x128xf32> to vector<1x128xf32>
    %33 = vector.shape_cast %32 : vector<1x128xf32> to vector<128xf32>
    %34 = vector.shape_cast %33 : vector<128xf32> to vector<1x1x128xf32>
    %35 = vector.broadcast %34 : vector<1x1x128xf32> to vector<8x8x128xf32>
    %36 = arith.mulf %35, %29 : vector<8x8x128xf32>
    %37 = vector.extract_strided_slice %26 {offsets = [1, 0], sizes = [1, 128], strides = [1, 1]} : vector<9x128xf32> to vector<1x128xf32>
    %38 = vector.shape_cast %37 : vector<1x128xf32> to vector<128xf32>
    %39 = vector.shape_cast %38 : vector<128xf32> to vector<1x1x128xf32>
    %40 = vector.broadcast %39 : vector<1x1x128xf32> to vector<8x8x128xf32>
    %41 = arith.mulf %40, %25 : vector<8x8x128xf32>
    %42 = arith.addf %36, %41 : vector<8x8x128xf32>
    %43 = vector.extract_strided_slice %26 {offsets = [2, 0], sizes = [1, 128], strides = [1, 1]} : vector<9x128xf32> to vector<1x128xf32>
    %44 = vector.shape_cast %43 : vector<1x128xf32> to vector<128xf32>
    %45 = vector.shape_cast %44 : vector<128xf32> to vector<1x1x128xf32>
    %46 = vector.broadcast %45 : vector<1x1x128xf32> to vector<8x8x128xf32>
    %47 = arith.mulf %46, %31 : vector<8x8x128xf32>
    %48 = arith.addf %42, %47 : vector<8x8x128xf32>
    %49 = vector.extract_strided_slice %26 {offsets = [3, 0], sizes = [1, 128], strides = [1, 1]} : vector<9x128xf32> to vector<1x128xf32>
    %50 = vector.shape_cast %49 : vector<1x128xf32> to vector<128xf32>
    %51 = vector.shape_cast %50 : vector<128xf32> to vector<1x1x128xf32>
    %52 = vector.broadcast %51 : vector<1x1x128xf32> to vector<8x8x128xf32>
    %53 = arith.mulf %52, %29 : vector<8x8x128xf32>
    %54 = vector.extract_strided_slice %26 {offsets = [4, 0], sizes = [1, 128], strides = [1, 1]} : vector<9x128xf32> to vector<1x128xf32>
    %55 = vector.shape_cast %54 : vector<1x128xf32> to vector<128xf32>
    %56 = vector.shape_cast %55 : vector<128xf32> to vector<1x1x128xf32>
    %57 = vector.broadcast %56 : vector<1x1x128xf32> to vector<8x8x128xf32>
    %58 = arith.mulf %57, %25 : vector<8x8x128xf32>
    %59 = arith.addf %53, %58 : vector<8x8x128xf32>
    %60 = vector.extract_strided_slice %26 {offsets = [5, 0], sizes = [1, 128], strides = [1, 1]} : vector<9x128xf32> to vector<1x128xf32>
    %61 = vector.shape_cast %60 : vector<1x128xf32> to vector<128xf32>
    %62 = vector.shape_cast %61 : vector<128xf32> to vector<1x1x128xf32>
    %63 = vector.broadcast %62 : vector<1x1x128xf32> to vector<8x8x128xf32>
    %64 = arith.mulf %63, %31 : vector<8x8x128xf32>
    %65 = arith.addf %59, %64 : vector<8x8x128xf32>
    %66 = vector.extract_strided_slice %26 {offsets = [6, 0], sizes = [1, 128], strides = [1, 1]} : vector<9x128xf32> to vector<1x128xf32>
    %67 = vector.shape_cast %66 : vector<1x128xf32> to vector<128xf32>
    %68 = vector.shape_cast %67 : vector<128xf32> to vector<1x1x128xf32>
    %69 = vector.broadcast %68 : vector<1x1x128xf32> to vector<8x8x128xf32>
    %70 = arith.mulf %69, %29 : vector<8x8x128xf32>
    %71 = vector.extract_strided_slice %26 {offsets = [7, 0], sizes = [1, 128], strides = [1, 1]} : vector<9x128xf32> to vector<1x128xf32>
    %72 = vector.shape_cast %71 : vector<1x128xf32> to vector<128xf32>
    %73 = vector.shape_cast %72 : vector<128xf32> to vector<1x1x128xf32>
    %74 = vector.broadcast %73 : vector<1x1x128xf32> to vector<8x8x128xf32>
    %75 = arith.mulf %74, %25 : vector<8x8x128xf32>
    %76 = arith.addf %70, %75 : vector<8x8x128xf32>
    %77 = vector.extract_strided_slice %26 {offsets = [8, 0], sizes = [1, 128], strides = [1, 1]} : vector<9x128xf32> to vector<1x128xf32>
    %78 = vector.shape_cast %77 : vector<1x128xf32> to vector<128xf32>
    %79 = vector.shape_cast %78 : vector<128xf32> to vector<1x1x128xf32>
    %80 = vector.broadcast %79 : vector<1x1x128xf32> to vector<8x8x128xf32>
    %81 = arith.mulf %80, %31 : vector<8x8x128xf32>
    %82 = arith.addf %76, %81 : vector<8x8x128xf32>
    %cst_16 = arith.constant 0.000000e+00 : f32
    %83 = vector.broadcast %cst_16 : f32 to vector<1x8x128xf32>
    %84 = vector.extract_strided_slice %48 {offsets = [0, 0, 0], sizes = [7, 8, 128], strides = [1, 1, 1]} : vector<8x8x128xf32> to vector<7x8x128xf32>
    %85 = tpu.concatenate %83, %84 in 0 : vector<1x8x128xf32>, vector<7x8x128xf32> -> vector<8x8x128xf32>
    %86 = arith.addf %65, %85 : vector<8x8x128xf32>
    %87 = vector.extract_strided_slice %82 {offsets = [1, 0, 0], sizes = [7, 8, 128], strides = [1, 1, 1]} : vector<8x8x128xf32> to vector<7x8x128xf32>
    %88 = tpu.concatenate %87, %83 in 0 : vector<7x8x128xf32>, vector<1x8x128xf32> -> vector<8x8x128xf32>
    %89 = arith.addf %86, %88 : vector<8x8x128xf32>
    %c0_17 = arith.constant 0 : index
    %c0_18 = arith.constant 0 : index
    %90 = vector.load %arg7[%c0_17, %c0_18] : memref<1x128xf32, #tpu.memory_space<vmem>>, vector<1x128xf32>
    %91 = vector.shape_cast %90 : vector<1x128xf32> to vector<1x1x128xf32>
    %92 = vector.broadcast %91 : vector<1x1x128xf32> to vector<8x8x128xf32>
    %93 = arith.addf %89, %92 : vector<8x8x128xf32>
    %94 = arith.negf %93 : vector<8x8x128xf32>
    %95 = math.exp %94 : vector<8x8x128xf32>
    %cst_19 = arith.constant 1.000000e+00 : f32
    %96 = vector.broadcast %cst_19 : f32 to vector<8x8x128xf32>
    %97 = arith.addf %96, %95 : vector<8x8x128xf32>
    %98 = arith.divf %96, %97 : vector<8x8x128xf32>
    %99 = arith.mulf %93, %98 : vector<8x8x128xf32>
    %100 = vector.shape_cast %99 : vector<8x8x128xf32> to vector<64x128xf32>
    %cst_20 = arith.constant dense<0.000000e+00> : vector<128xf32>
    %101 = vector.multi_reduction <add>, %100, %cst_20 [0] : vector<64x128xf32> to vector<128xf32>
    %102 = vector.shape_cast %101 : vector<128xf32> to vector<1x128xf32>
    %cst_21 = arith.constant 1.562500e-02 : f32
    %103 = vector.broadcast %cst_21 : f32 to vector<1x128xf32>
    %104 = arith.mulf %102, %103 : vector<1x128xf32>
    %c0_22 = arith.constant 0 : index
    %c0_23 = arith.constant 0 : index
    %105 = vector.load %arg8[%c0_22, %c0_23] : memref<128x128xf32, #tpu.memory_space<vmem>>, vector<128x128xf32>
    %cst_24 = arith.constant dense<0.000000e+00> : vector<1x128xf32>
    %106 = tpu.matmul %104, %105, %cst_24 {dimension_numbers = #tpu.dot_dimension_numbers<[1], [0], [0], [1], [0, 0, 1, 1], [], []>} : vector<1x128xf32>, vector<128x128xf32>, vector<1x128xf32> -> vector<1x128xf32>
    %c0_25 = arith.constant 0 : index
    %c0_26 = arith.constant 0 : index
    %107 = vector.load %arg9[%c0_25, %c0_26] : memref<1x128xf32, #tpu.memory_space<vmem>>, vector<1x128xf32>
    %108 = arith.addf %106, %107 : vector<1x128xf32>
    %109 = arith.negf %108 : vector<1x128xf32>
    %110 = math.exp %109 : vector<1x128xf32>
    %cst_27 = arith.constant 1.000000e+00 : f32
    %111 = vector.broadcast %cst_27 : f32 to vector<1x128xf32>
    %112 = arith.addf %111, %110 : vector<1x128xf32>
    %113 = arith.divf %111, %112 : vector<1x128xf32>
    %114 = arith.mulf %108, %113 : vector<1x128xf32>
    %c0_28 = arith.constant 0 : index
    %c0_29 = arith.constant 0 : index
    %115 = vector.load %arg10[%c0_28, %c0_29] : memref<128x128xf32, #tpu.memory_space<vmem>>, vector<128x128xf32>
    %cst_30 = arith.constant dense<0.000000e+00> : vector<1x128xf32>
    %116 = tpu.matmul %114, %115, %cst_30 {dimension_numbers = #tpu.dot_dimension_numbers<[1], [0], [0], [1], [0, 0, 1, 1], [], []>} : vector<1x128xf32>, vector<128x128xf32>, vector<1x128xf32> -> vector<1x128xf32>
    %c0_31 = arith.constant 0 : index
    %c0_32 = arith.constant 0 : index
    %117 = vector.load %arg11[%c0_31, %c0_32] : memref<1x128xf32, #tpu.memory_space<vmem>>, vector<1x128xf32>
    %118 = arith.addf %116, %117 : vector<1x128xf32>
    %119 = tpu.iota {dimensions = array<i32: 1>} : vector<1x128xi32>
    %c64_i32 = arith.constant 64 : i32
    %120 = vector.broadcast %c64_i32 : i32 to vector<1x128xi32>
    %121 = arith.cmpi slt, %119, %120 : vector<1x128xi32>
    %122 = arith.negf %118 : vector<1x128xf32>
    %123 = math.exp %122 : vector<1x128xf32>
    %cst_33 = arith.constant 1.000000e+00 : f32
    %124 = vector.broadcast %cst_33 : f32 to vector<1x128xf32>
    %125 = arith.addf %124, %123 : vector<1x128xf32>
    %126 = arith.divf %124, %125 : vector<1x128xf32>
    %cst_34 = arith.constant 1.000000e+00 : f32
    %127 = vector.broadcast %cst_34 : f32 to vector<1x128xf32>
    %128 = arith.select %121, %126, %127 : vector<1x128xi1>, vector<1x128xf32>
    %129 = vector.shape_cast %128 : vector<1x128xf32> to vector<1x1x128xf32>
    %c0_35 = arith.constant 0 : index
    %c0_36 = arith.constant 0 : index
    %c0_37 = arith.constant 0 : index
    %130 = vector.load %arg13[%c0_35, %c0_36, %c0_37] : memref<1x1x128xf32, #tpu.memory_space<vmem>>, vector<1x1x128xf32>
    tpu.vector_store %arg13[%c0_35, %c0_36, %c0_37], %129 {strides = array<i32>} : memref<1x1x128xf32, #tpu.memory_space<vmem>>, vector<1x1x128xf32>,
    %c64_i32_38 = arith.constant 64 : i32
    %131 = tpu.dynamic_rotate %12 by %c64_i32_38 dim 1 : vector<64x128xf32>, i32 -> vector<64x128xf32>
    %132 = arith.addf %100, %131 : vector<64x128xf32>
    %133 = vector.shape_cast %132 : vector<64x128xf32> to vector<1x64x128xf32>
    %134 = arith.truncf %133 : vector<1x64x128xf32> to vector<1x64x128xbf16>
    %c0_39 = arith.constant 0 : index
    %c0_40 = arith.constant 0 : index
    %c0_41 = arith.constant 0 : index
    %135 = vector.load %arg12[%c0_39, %c0_40, %c0_41] : memref<1x64x128xbf16, #tpu.memory_space<vmem>>, vector<1x64x128xbf16>
    tpu.vector_store %arg12[%c0_39, %c0_40, %c0_41], %134 {strides = array<i32>} : memref<1x64x128xbf16, #tpu.memory_space<vmem>>, vector<1x64x128xbf16>,
    return
  }
  func.func @transform_0(%arg0: i32) -> (i32, i32, i32) {
    %c0_i32 = arith.constant 0 : i32
    %c0_i32_0 = arith.constant 0 : i32
    %c0_i32_1 = arith.constant 0 : i32
    return %arg0, %c0_i32, %c0_i32_0 : i32, i32, i32
  }
  func.func @transform_1(%arg0: i32) -> (i32, i32) {
    %c0_i32 = arith.constant 0 : i32
    %c0_i32_0 = arith.constant 0 : i32
    %c0_i32_1 = arith.constant 0 : i32
    return %c0_i32, %c0_i32_0 : i32, i32
  }
  func.func @transform_2(%arg0: i32) -> (i32, i32) {
    %c0_i32 = arith.constant 0 : i32
    %c0_i32_0 = arith.constant 0 : i32
    %c0_i32_1 = arith.constant 0 : i32
    return %c0_i32, %c0_i32_0 : i32, i32
  }
  func.func @transform_3(%arg0: i32) -> (i32, i32) {
    %c0_i32 = arith.constant 0 : i32
    %c0_i32_0 = arith.constant 0 : i32
    %c0_i32_1 = arith.constant 0 : i32
    return %c0_i32, %c0_i32_0 : i32, i32
  }
  func.func @transform_4(%arg0: i32) -> (i32, i32) {
    %c0_i32 = arith.constant 0 : i32
    %c0_i32_0 = arith.constant 0 : i32
    %c0_i32_1 = arith.constant 0 : i32
    return %c0_i32, %c0_i32_0 : i32, i32
  }
  func.func @transform_5(%arg0: i32) -> (i32, i32) {
    %c0_i32 = arith.constant 0 : i32
    %c0_i32_0 = arith.constant 0 : i32
    %c0_i32_1 = arith.constant 0 : i32
    return %c0_i32, %c0_i32_0 : i32, i32
  }
  func.func @transform_6(%arg0: i32) -> (i32, i32) {
    %c0_i32 = arith.constant 0 : i32
    %c0_i32_0 = arith.constant 0 : i32
    %c0_i32_1 = arith.constant 0 : i32
    return %c0_i32, %c0_i32_0 : i32, i32
  }
  func.func @transform_7(%arg0: i32) -> (i32, i32) {
    %c0_i32 = arith.constant 0 : i32
    %c0_i32_0 = arith.constant 0 : i32
    %c0_i32_1 = arith.constant 0 : i32
    return %c0_i32, %c0_i32_0 : i32, i32
  }
  func.func @transform_8(%arg0: i32) -> (i32, i32) {
    %c0_i32 = arith.constant 0 : i32
    %c0_i32_0 = arith.constant 0 : i32
    %c0_i32_1 = arith.constant 0 : i32
    return %c0_i32, %c0_i32_0 : i32, i32
  }
  func.func @transform_9(%arg0: i32) -> (i32, i32) {
    %c0_i32 = arith.constant 0 : i32
    %c0_i32_0 = arith.constant 0 : i32
    %c0_i32_1 = arith.constant 0 : i32
    return %c0_i32, %c0_i32_0 : i32, i32
  }
  func.func @transform_10(%arg0: i32) -> (i32, i32) {
    %c0_i32 = arith.constant 0 : i32
    %c0_i32_0 = arith.constant 0 : i32
    %c0_i32_1 = arith.constant 0 : i32
    return %c0_i32, %c0_i32_0 : i32, i32
  }
  func.func @transform_11(%arg0: i32) -> (i32, i32, i32) {
    %c0_i32 = arith.constant 0 : i32
    %c0_i32_0 = arith.constant 0 : i32
    %c0_i32_1 = arith.constant 0 : i32
    return %arg0, %c0_i32, %c0_i32_0 : i32, i32, i32
  }
  func.func @transform_12(%arg0: i32) -> (i32, i32, i32) {
    %c0_i32 = arith.constant 0 : i32
    %c0_i32_0 = arith.constant 0 : i32
    %c0_i32_1 = arith.constant 0 : i32
    return %arg0, %c0_i32, %c0_i32_0 : i32, i32, i32
  }
}

module attributes {stable_mosaic.version = 11 : i64} {
  func.func @_head_fc_kernel(%arg0: i32, %arg1: i32, %arg2: memref<1x64x128xbf16, #tpu.memory_space<vmem>>, %arg3: memref<1x1x128xf32, #tpu.memory_space<vmem>>, %arg4: memref<128x128xbf16, #tpu.memory_space<vmem>>, %arg5: memref<1x128xf32, #tpu.memory_space<vmem>>, %arg6: memref<128x128xbf16, #tpu.memory_space<vmem>>, %arg7: memref<1x128xf32, #tpu.memory_space<vmem>>, %arg8: memref<128x128xbf16, #tpu.memory_space<vmem>>, %arg9: memref<1x128xf32, #tpu.memory_space<vmem>>, %arg10: memref<1x1x128xf32, #tpu.memory_space<vmem>>, %arg11: memref<1x128xf32, #tpu.memory_space<vmem>>) attributes {dimension_semantics = [#tpu.dimension_semantics<parallel>, #tpu.dimension_semantics<arbitrary>], iteration_bounds = array<i64: 2, 1>, scalar_prefetch = 0 : i64, scratch_operands = 1 : i64, tpu.core_type = #tpu.core_type<tc>, window_params = [{transform_indices = @transform_0, window_bounds = array<i64: 1, 64, 128>}, {transform_indices = @transform_1, window_bounds = array<i64: 1, 1, 128>}, {pipeline_mode = #tpu.pipeline_mode<synchronous>, transform_indices = @transform_2, window_bounds = array<i64: 128, 128>}, {pipeline_mode = #tpu.pipeline_mode<synchronous>, transform_indices = @transform_3, window_bounds = array<i64: 1, 128>}, {pipeline_mode = #tpu.pipeline_mode<synchronous>, transform_indices = @transform_4, window_bounds = array<i64: 128, 128>}, {pipeline_mode = #tpu.pipeline_mode<synchronous>, transform_indices = @transform_5, window_bounds = array<i64: 1, 128>}, {pipeline_mode = #tpu.pipeline_mode<synchronous>, transform_indices = @transform_6, window_bounds = array<i64: 128, 128>}, {pipeline_mode = #tpu.pipeline_mode<synchronous>, transform_indices = @transform_7, window_bounds = array<i64: 1, 128>}, {transform_indices = @transform_8, window_bounds = array<i64: 1, 1, 128>}]} {
    %c0_i32 = arith.constant 0 : i32
    %0 = arith.cmpi eq, %arg1, %c0_i32 : i32
    %1 = arith.extui %0 : i1 to i32
    %c0_i32_0 = arith.constant 0 : i32
    %2 = arith.cmpi ne, %1, %c0_i32_0 : i32
    scf.if %2 {
      %cst_23 = arith.constant 0.000000e+00 : f32
      %36 = vector.broadcast %cst_23 : f32 to vector<1x128xf32>
      %c0_24 = arith.constant 0 : index
      %c0_25 = arith.constant 0 : index
      %37 = vector.load %arg11[%c0_24, %c0_25] : memref<1x128xf32, #tpu.memory_space<vmem>>, vector<1x128xf32>
      tpu.vector_store %arg11[%c0_24, %c0_25], %36 {strides = array<i32>} : memref<1x128xf32, #tpu.memory_space<vmem>>, vector<1x128xf32>,
    } else {
    }
    %c0 = arith.constant 0 : index
    %c0_1 = arith.constant 0 : index
    %c0_2 = arith.constant 0 : index
    %3 = vector.load %arg2[%c0, %c0_1, %c0_2] : memref<1x64x128xbf16, #tpu.memory_space<vmem>>, vector<1x64x128xbf16>
    %4 = vector.shape_cast %3 : vector<1x64x128xbf16> to vector<64x128xbf16>
    %5 = arith.extf %4 : vector<64x128xbf16> to vector<64x128xf32>
    %c0_3 = arith.constant 0 : index
    %c0_4 = arith.constant 0 : index
    %c0_5 = arith.constant 0 : index
    %6 = vector.load %arg3[%c0_3, %c0_4, %c0_5] : memref<1x1x128xf32, #tpu.memory_space<vmem>>, vector<1x1x128xf32>
    %7 = vector.shape_cast %6 : vector<1x1x128xf32> to vector<1x128xf32>
    %8 = vector.broadcast %7 : vector<1x128xf32> to vector<64x128xf32>
    %9 = arith.mulf %5, %8 : vector<64x128xf32>
    %10 = arith.truncf %9 : vector<64x128xf32> to vector<64x128xbf16>
    %c0_6 = arith.constant 0 : index
    %c0_7 = arith.constant 0 : index
    %11 = vector.load %arg4[%c0_6, %c0_7] : memref<128x128xbf16, #tpu.memory_space<vmem>>, vector<128x128xbf16>
    %cst = arith.constant dense<0.000000e+00> : vector<64x128xf32>
    %12 = tpu.matmul %10, %11, %cst {dimension_numbers = #tpu.dot_dimension_numbers<[1], [0], [0], [1], [0, 0, 1, 1], [], []>} : vector<64x128xbf16>, vector<128x128xbf16>, vector<64x128xf32> -> vector<64x128xf32>
    %c0_8 = arith.constant 0 : index
    %c0_9 = arith.constant 0 : index
    %13 = vector.load %arg5[%c0_8, %c0_9] : memref<1x128xf32, #tpu.memory_space<vmem>>, vector<1x128xf32>
    %14 = vector.broadcast %13 : vector<1x128xf32> to vector<64x128xf32>
    %15 = arith.addf %12, %14 : vector<64x128xf32>
    %16 = arith.truncf %15 : vector<64x128xf32> to vector<64x128xbf16>
    %c0_10 = arith.constant 0 : index
    %c0_11 = arith.constant 0 : index
    %17 = vector.load %arg6[%c0_10, %c0_11] : memref<128x128xbf16, #tpu.memory_space<vmem>>, vector<128x128xbf16>
    %cst_12 = arith.constant dense<0.000000e+00> : vector<64x128xf32>
    %18 = tpu.matmul %16, %17, %cst_12 {dimension_numbers = #tpu.dot_dimension_numbers<[1], [0], [0], [1], [0, 0, 1, 1], [], []>} : vector<64x128xbf16>, vector<128x128xbf16>, vector<64x128xf32> -> vector<64x128xf32>
    %c0_13 = arith.constant 0 : index
    %c0_14 = arith.constant 0 : index
    %19 = vector.load %arg7[%c0_13, %c0_14] : memref<1x128xf32, #tpu.memory_space<vmem>>, vector<1x128xf32>
    %20 = vector.broadcast %19 : vector<1x128xf32> to vector<64x128xf32>
    %21 = arith.addf %18, %20 : vector<64x128xf32>
    %22 = arith.negf %21 : vector<64x128xf32>
    %23 = math.exp %22 : vector<64x128xf32>
    %cst_15 = arith.constant 1.000000e+00 : f32
    %24 = vector.broadcast %cst_15 : f32 to vector<64x128xf32>
    %25 = arith.addf %24, %23 : vector<64x128xf32>
    %26 = arith.divf %24, %25 : vector<64x128xf32>
    %27 = arith.mulf %21, %26 : vector<64x128xf32>
    %c0_16 = arith.constant 0 : index
    %c0_17 = arith.constant 0 : index
    %28 = vector.load %arg11[%c0_16, %c0_17] : memref<1x128xf32, #tpu.memory_space<vmem>>, vector<1x128xf32>
    %cst_18 = arith.constant dense<0.000000e+00> : vector<128xf32>
    %29 = vector.multi_reduction <add>, %27, %cst_18 [0] : vector<64x128xf32> to vector<128xf32>
    %30 = vector.shape_cast %29 : vector<128xf32> to vector<1x128xf32>
    %31 = arith.addf %28, %30 : vector<1x128xf32>
    %c0_19 = arith.constant 0 : index
    %c0_20 = arith.constant 0 : index
    %32 = vector.load %arg11[%c0_19, %c0_20] : memref<1x128xf32, #tpu.memory_space<vmem>>, vector<1x128xf32>
    tpu.vector_store %arg11[%c0_19, %c0_20], %31 {strides = array<i32>} : memref<1x128xf32, #tpu.memory_space<vmem>>, vector<1x128xf32>,
    %c0_i32_21 = arith.constant 0 : i32
    %33 = arith.cmpi eq, %arg1, %c0_i32_21 : i32
    %34 = arith.extui %33 : i1 to i32
    %c0_i32_22 = arith.constant 0 : i32
    %35 = arith.cmpi ne, %34, %c0_i32_22 : i32
    scf.if %35 {
      %c0_23 = arith.constant 0 : index
      %c0_24 = arith.constant 0 : index
      %36 = vector.load %arg11[%c0_23, %c0_24] : memref<1x128xf32, #tpu.memory_space<vmem>>, vector<1x128xf32>
      %cst_25 = arith.constant 1.562500e-02 : f32
      %37 = vector.broadcast %cst_25 : f32 to vector<1x128xf32>
      %38 = arith.mulf %36, %37 : vector<1x128xf32>
      %39 = arith.truncf %38 : vector<1x128xf32> to vector<1x128xbf16>
      %c0_26 = arith.constant 0 : index
      %c0_27 = arith.constant 0 : index
      %40 = vector.load %arg8[%c0_26, %c0_27] : memref<128x128xbf16, #tpu.memory_space<vmem>>, vector<128x128xbf16>
      %cst_28 = arith.constant dense<0.000000e+00> : vector<1x128xf32>
      %41 = tpu.matmul %39, %40, %cst_28 {dimension_numbers = #tpu.dot_dimension_numbers<[1], [0], [0], [1], [0, 0, 1, 1], [], []>} : vector<1x128xbf16>, vector<128x128xbf16>, vector<1x128xf32> -> vector<1x128xf32>
      %c0_29 = arith.constant 0 : index
      %c0_30 = arith.constant 0 : index
      %42 = vector.load %arg9[%c0_29, %c0_30] : memref<1x128xf32, #tpu.memory_space<vmem>>, vector<1x128xf32>
      %43 = arith.addf %41, %42 : vector<1x128xf32>
      %44 = vector.shape_cast %43 : vector<1x128xf32> to vector<1x1x128xf32>
      %c0_31 = arith.constant 0 : index
      %c0_32 = arith.constant 0 : index
      %c0_33 = arith.constant 0 : index
      %45 = vector.load %arg10[%c0_31, %c0_32, %c0_33] : memref<1x1x128xf32, #tpu.memory_space<vmem>>, vector<1x1x128xf32>
      tpu.vector_store %arg10[%c0_31, %c0_32, %c0_33], %44 {strides = array<i32>} : memref<1x1x128xf32, #tpu.memory_space<vmem>>, vector<1x1x128xf32>,
    } else {
    }
    return
  }
  func.func @transform_0(%arg0: i32, %arg1: i32) -> (i32, i32, i32) {
    %c0_i32 = arith.constant 0 : i32
    %c0_i32_0 = arith.constant 0 : i32
    return %arg0, %arg1, %c0_i32 : i32, i32, i32
  }
  func.func @transform_1(%arg0: i32, %arg1: i32) -> (i32, i32, i32) {
    %c0_i32 = arith.constant 0 : i32
    %c0_i32_0 = arith.constant 0 : i32
    %c0_i32_1 = arith.constant 0 : i32
    return %arg0, %c0_i32, %c0_i32_0 : i32, i32, i32
  }
  func.func @transform_2(%arg0: i32, %arg1: i32) -> (i32, i32) {
    %c0_i32 = arith.constant 0 : i32
    %c0_i32_0 = arith.constant 0 : i32
    %c0_i32_1 = arith.constant 0 : i32
    return %c0_i32, %c0_i32_0 : i32, i32
  }
  func.func @transform_3(%arg0: i32, %arg1: i32) -> (i32, i32) {
    %c0_i32 = arith.constant 0 : i32
    %c0_i32_0 = arith.constant 0 : i32
    %c0_i32_1 = arith.constant 0 : i32
    return %c0_i32, %c0_i32_0 : i32, i32
  }
  func.func @transform_4(%arg0: i32, %arg1: i32) -> (i32, i32) {
    %c0_i32 = arith.constant 0 : i32
    %c0_i32_0 = arith.constant 0 : i32
    %c0_i32_1 = arith.constant 0 : i32
    return %c0_i32, %c0_i32_0 : i32, i32
  }
  func.func @transform_5(%arg0: i32, %arg1: i32) -> (i32, i32) {
    %c0_i32 = arith.constant 0 : i32
    %c0_i32_0 = arith.constant 0 : i32
    %c0_i32_1 = arith.constant 0 : i32
    return %c0_i32, %c0_i32_0 : i32, i32
  }
  func.func @transform_6(%arg0: i32, %arg1: i32) -> (i32, i32) {
    %c0_i32 = arith.constant 0 : i32
    %c0_i32_0 = arith.constant 0 : i32
    %c0_i32_1 = arith.constant 0 : i32
    return %c0_i32, %c0_i32_0 : i32, i32
  }
  func.func @transform_7(%arg0: i32, %arg1: i32) -> (i32, i32) {
    %c0_i32 = arith.constant 0 : i32
    %c0_i32_0 = arith.constant 0 : i32
    %c0_i32_1 = arith.constant 0 : i32
    return %c0_i32, %c0_i32_0 : i32, i32
  }
  func.func @transform_8(%arg0: i32, %arg1: i32) -> (i32, i32, i32) {
    %c0_i32 = arith.constant 0 : i32
    %c0_i32_0 = arith.constant 0 : i32
    %c0_i32_1 = arith.constant 0 : i32
    return %arg0, %c0_i32, %c0_i32_0 : i32, i32, i32
  }
}

</mosaic_0001>

<llo_original>
// kernel: enetv2_forward.3
$region0: #{enetv2_forward.3}
  #allocation0 [shape = 'u32[]', space=smem, size = 0x4, offset = 0x4, fixed_abs, tag = 'smem constant byte address 0x4 - core index']
  #allocation1 [shape = 'u32[144,128]{1,0:T(1,128)}', space=vmem, size = 0x12000, scoped, tag = 'internal scratch']
  #allocation2 [shape = 'f32[1,128]{1,0:T(1,128)}', space=vmem, size = 0x200, scoped, tag = 'scratch operand']
  %s0 = inlined_call_operand.vmem [shape: bf16[2,64,128], index: 0, kind: input, shape index: {}]
  %s1 = inlined_call_operand.vmem [shape: f32[2,1,128], index: 1, kind: input, shape index: {}]
  %s2 = inlined_call_operand.vmem [shape: bf16[128,128], index: 2, kind: input, shape index: {}]
  %s3 = inlined_call_operand.vmem [shape: f32[1,128], index: 3, kind: input, shape index: {}]
  %s4 = inlined_call_operand.vmem [shape: bf16[128,128], index: 4, kind: input, shape index: {}]
  %s5 = inlined_call_operand.vmem [shape: f32[1,128], index: 5, kind: input, shape index: {}]
  %s6 = inlined_call_operand.vmem [shape: bf16[128,128], index: 6, kind: input, shape index: {}]
  %s7 = inlined_call_operand.vmem [shape: f32[1,128], index: 7, kind: input, shape index: {}]
  %s8 = inlined_call_operand.hbm [shape: f32[2,1,128], index: 8, kind: output, shape index: {}]
  %s9 = sld [smem:[#allocation0]]
  $region73: #{enetv2_forward.3} parent=0
    _
  %s11 = ssub.s32 1, %s9
  %s12 = scalar_select 0, %s11, %s9
  $region1: #{enetv2_forward.3} parent=0
    #allocation3 [shape = 'u8[1024]{0}', space=vmem, size = 0x400, scoped, tag = 'output window, operand 0']
    #allocation4 [shape = 's32[2]{0}', space=sflag, size = 0x8, scoped, tag = 'scoped memory for enetv2_forward.3']
    %13 = vsyncpa [#allocation4], 0
    %s14 = scalar_lea.sflag [#allocation4], 1
    %15 = vsyncpa %s14, 0
    loop: start=0, step=1, limit=4
    $region2: #{enetv2_forward.3} parent=1 // loop_pre_header
      _
    $region3: #{enetv2_forward.3} parent=1 // loop_header
      %s17 = sphi 0, %s21
      %p18 = scmp.ge.s32.totalorder %s17, 4
      %s24 = sphi 0, %s36
      %s25 = sphi 0, %s32
      %s26 = sphi 0, %s24
      %s27 = sphi 0, %s25
      %s28 = sphi 0, %s26
      %s29 = sphi 0, %s27
      %s41 = sphi 0, %s43
      %s44 = sphi 0, %s41
      %s45 = sphi 0, %s44
      %s61 = sphi 0, %s45
      %s67 = sphi 0, %s69
      %s70 = sphi 0, %s67
      %s71 = sphi 0, %s70
      %s87 = sphi 0, %s71
      %s91 = sphi 0, %s91
      %s93 = sphi 0, %s91
      %s94 = sphi 0, %s93
      %s108 = sphi 0, %s94
      %s112 = sphi 0, %s112
      %s114 = sphi 0, %s112
      %s115 = sphi 0, %s114
      %s129 = sphi 0, %s115
      %s133 = sphi 0, %s133
      %s135 = sphi 0, %s133
      %s136 = sphi 0, %s135
      %s150 = sphi 0, %s136
      %s154 = sphi 0, %s154
      %s156 = sphi 0, %s154
      %s157 = sphi 0, %s156
      %s171 = sphi 0, %s157
      %s175 = sphi 0, %s175
      %s177 = sphi 0, %s175
      %s178 = sphi 0, %s177
      %s192 = sphi 0, %s178
      %s196 = sphi 0, %s196
      %s198 = sphi 0, %s196
      %s199 = sphi 0, %s198
      %s213 = sphi 0, %s199
      %s219 = sphi 0, %s221
      %s222 = sphi 0, %s219
      %s223 = sphi 0, %s222
      %s239 = sphi 0, %s223
    $region4: #{enetv2_forward.3} parent=1 // loop_header_branch
      %20 = sbr.rel (%p18) target = $region8
    $region5: #{enetv2_forward.3} parent=1 // loop_body
      %s22 = ssub.s32 %s17, 1
      %s23 = ssub.s32 %s17, 2
      %s30 = sadd.s32 1, %s25
      %p31 = scmp.ge.s32.totalorder %s30, 1
      %s32 = scalar_select %p31, 0, %s30
      %s33 = sadd.s32 1, %s24
      %s34 = scalar_select %p31, %s33, %s24
      %p35 = scmp.ge.s32.totalorder %s34, 2
      %s36 = scalar_select %p35, 0, %s34
      %s37 = ssub.s32 %s24, %s36
      %s38 = ssub.s32 %s25, %s32
      %s39 = sor.u32 %s37, %s38
      %p40 = scmp.eq.s32.totalorder %s39, 0
      %s42 = sadd.s32 %s41, 1
      %s43 = scalar_select %p40, %s41, %s42
      %p46 = pneg %p40
      %p47 = scmp.eq.s32.totalorder %s17, 1
      %p48 = por %p46, %p47
      %p49 = scmp.ne.s32.totalorder %s41, %s44
      %p50 = scmp.eq.s32.totalorder %s17, 0
      %p51 = por %p49, %p50
      %p52 = scmp.ne.s32.totalorder %s41, %s44
      %p53 = scmp.eq.s32.totalorder %s22, 1
      %p54 = por %p52, %p53
      %p55 = scmp.ne.s32.totalorder %s44, %s45
      %p56 = scmp.eq.s32.totalorder %s22, 0
      %p57 = por %p55, %p56
      %p58 = scmp.ne.s32.totalorder %s44, %s45
      %p59 = scmp.eq.s32.totalorder %s23, 1
      %p60 = por %p58, %p59
      %p62 = scmp.ne.s32.totalorder %s45, %s61
      %p63 = scmp.eq.s32.totalorder %s23, 0
      %p64 = por %p62, %p63
      %s65 = ssub.s32 %s24, %s36
      %p66 = scmp.eq.s32.totalorder %s65, 0
      %s68 = sadd.s32 %s67, 1
      %s69 = scalar_select %p66, %s67, %s68
      %p72 = pneg %p66
      %p73 = scmp.eq.s32.totalorder %s17, 1
      %p74 = por %p72, %p73
      %p75 = scmp.ne.s32.totalorder %s67, %s70
      %p76 = scmp.eq.s32.totalorder %s17, 0
      %p77 = por %p75, %p76
      %p78 = scmp.ne.s32.totalorder %s67, %s70
      %p79 = scmp.eq.s32.totalorder %s22, 1
      %p80 = por %p78, %p79
      %p81 = scmp.ne.s32.totalorder %s70, %s71
      %p82 = scmp.eq.s32.totalorder %s22, 0
      %p83 = por %p81, %p82
      %p84 = scmp.ne.s32.totalorder %s70, %s71
      %p85 = scmp.eq.s32.totalorder %s23, 1
      %p86 = por %p84, %p85
      %p88 = scmp.ne.s32.totalorder %s71, %s87
      %p89 = scmp.eq.s32.totalorder %s23, 0
      %p90 = por %p88, %p89
      %s92 = sadd.s32 %s91, 1
      %p95 = scmp.eq.s32.totalorder %s17, 1
      %p96 = scmp.ne.s32.totalorder %s91, %s93
      %p97 = scmp.eq.s32.totalorder %s17, 0
      %p98 = por %p96, %p97
      %p99 = scmp.ne.s32.totalorder %s91, %s93
      %p100 = scmp.eq.s32.totalorder %s22, 1
      %p101 = por %p99, %p100
      %p102 = scmp.ne.s32.totalorder %s93, %s94
      %p103 = scmp.eq.s32.totalorder %s22, 0
      %p104 = por %p102, %p103
      %p105 = scmp.ne.s32.totalorder %s93, %s94
      %p106 = scmp.eq.s32.totalorder %s23, 1
      %p107 = por %p105, %p106
      %p109 = scmp.ne.s32.totalorder %s94, %s108
      %p110 = scmp.eq.s32.totalorder %s23, 0
      %p111 = por %p109, %p110
      %s113 = sadd.s32 %s112, 1
      %p116 = scmp.eq.s32.totalorder %s17, 1
      %p117 = scmp.ne.s32.totalorder %s112, %s114
      %p118 = scmp.eq.s32.totalorder %s17, 0
      %p119 = por %p117, %p118
      %p120 = scmp.ne.s32.totalorder %s112, %s114
      %p121 = scmp.eq.s32.totalorder %s22, 1
      %p122 = por %p120, %p121
      %p123 = scmp.ne.s32.totalorder %s114, %s115
      %p124 = scmp.eq.s32.totalorder %s22, 0
      %p125 = por %p123, %p124
      %p126 = scmp.ne.s32.totalorder %s114, %s115
      %p127 = scmp.eq.s32.totalorder %s23, 1
      %p128 = por %p126, %p127
      %p130 = scmp.ne.s32.totalorder %s115, %s129
      %p131 = scmp.eq.s32.totalorder %s23, 0
      %p132 = por %p130, %p131
      %s134 = sadd.s32 %s133, 1
      %p137 = scmp.eq.s32.totalorder %s17, 1
      %p138 = scmp.ne.s32.totalorder %s133, %s135
      %p139 = scmp.eq.s32.totalorder %s17, 0
      %p140 = por %p138, %p139
      %p141 = scmp.ne.s32.totalorder %s133, %s135
      %p142 = scmp.eq.s32.totalorder %s22, 1
      %p143 = por %p141, %p142
      %p144 = scmp.ne.s32.totalorder %s135, %s136
      %p145 = scmp.eq.s32.totalorder %s22, 0
      %p146 = por %p144, %p145
      %p147 = scmp.ne.s32.totalorder %s135, %s136
      %p148 = scmp.eq.s32.totalorder %s23, 1
      %p149 = por %p147, %p148
      %p151 = scmp.ne.s32.totalorder %s136, %s150
      %p152 = scmp.eq.s32.totalorder %s23, 0
      %p153 = por %p151, %p152
      %s155 = sadd.s32 %s154, 1
      %p158 = scmp.eq.s32.totalorder %s17, 1
      %p159 = scmp.ne.s32.totalorder %s154, %s156
      %p160 = scmp.eq.s32.totalorder %s17, 0
      %p161 = por %p159, %p160
      %p162 = scmp.ne.s32.totalorder %s154, %s156
      %p163 = scmp.eq.s32.totalorder %s22, 1
      %p164 = por %p162, %p163
      %p165 = scmp.ne.s32.totalorder %s156, %s157
      %p166 = scmp.eq.s32.totalorder %s22, 0
      %p167 = por %p165, %p166
      %p168 = scmp.ne.s32.totalorder %s156, %s157
      %p169 = scmp.eq.s32.totalorder %s23, 1
      %p170 = por %p168, %p169
      %p172 = scmp.ne.s32.totalorder %s157, %s171
      %p173 = scmp.eq.s32.totalorder %s23, 0
      %p174 = por %p172, %p173
      %s176 = sadd.s32 %s175, 1
      %p179 = scmp.eq.s32.totalorder %s17, 1
      %p180 = scmp.ne.s32.totalorder %s175, %s177
      %p181 = scmp.eq.s32.totalorder %s17, 0
      %p182 = por %p180, %p181
      %p183 = scmp.ne.s32.totalorder %s175, %s177
      %p184 = scmp.eq.s32.totalorder %s22, 1
      %p185 = por %p183, %p184
      %p186 = scmp.ne.s32.totalorder %s177, %s178
      %p187 = scmp.eq.s32.totalorder %s22, 0
      %p188 = por %p186, %p187
      %p189 = scmp.ne.s32.totalorder %s177, %s178
      %p190 = scmp.eq.s32.totalorder %s23, 1
      %p191 = por %p189, %p190
      %p193 = scmp.ne.s32.totalorder %s178, %s192
      %p194 = scmp.eq.s32.totalorder %s23, 0
      %p195 = por %p193, %p194
      %s197 = sadd.s32 %s196, 1
      %p200 = scmp.eq.s32.totalorder %s17, 1
      %p201 = scmp.ne.s32.totalorder %s196, %s198
      %p202 = scmp.eq.s32.totalorder %s17, 0
      %p203 = por %p201, %p202
      %p204 = scmp.ne.s32.totalorder %s196, %s198
      %p205 = scmp.eq.s32.totalorder %s22, 1
      %p206 = por %p204, %p205
      %p207 = scmp.ne.s32.totalorder %s198, %s199
      %p208 = scmp.eq.s32.totalorder %s22, 0
      %p209 = por %p207, %p208
      %p210 = scmp.ne.s32.totalorder %s198, %s199
      %p211 = scmp.eq.s32.totalorder %s23, 1
      %p212 = por %p210, %p211
      %p214 = scmp.ne.s32.totalorder %s199, %s213
      %p215 = scmp.eq.s32.totalorder %s23, 0
      %p216 = por %p214, %p215
      %s217 = ssub.s32 %s24, %s36
      %p218 = scmp.eq.s32.totalorder %s217, 0
      %s220 = sadd.s32 %s219, 1
      %s221 = scalar_select %p218, %s219, %s220
      %p224 = pneg %p218
      %p225 = scmp.eq.s32.totalorder %s17, 1
      %p226 = por %p224, %p225
      %p227 = scmp.ne.s32.totalorder %s219, %s222
      %p228 = scmp.eq.s32.totalorder %s17, 0
      %p229 = por %p227, %p228
      %p230 = scmp.ne.s32.totalorder %s219, %s222
      %p231 = scmp.eq.s32.totalorder %s22, 1
      %p232 = por %p230, %p231
      %p233 = scmp.ne.s32.totalorder %s222, %s223
      %p234 = scmp.eq.s32.totalorder %s22, 0
      %p235 = por %p233, %p234
      %p236 = scmp.ne.s32.totalorder %s222, %s223
      %p237 = scmp.eq.s32.totalorder %s23, 1
      %p238 = por %p236, %p237
      %p240 = scmp.ne.s32.totalorder %s223, %s239
      %p241 = scmp.eq.s32.totalorder %s23, 0
      %p242 = por %p240, %p241
      %p243 = scmp.le.s32.totalorder 1, %s17
      %p244 = scmp.lt.s32.totalorder %s17, 3
      %p245 = pnand %p243, %p244
      %p246 = pneg %p245
      // Predicated region
      $region9: #{enetv2_forward.3} parent=5 // pred_check
        _
      $region10: #{enetv2_forward.3} parent=5 // pred_check_branch
        %248 = sbr.rel (%p245) target = $region12
      $region11: #{enetv2_forward.3} parent=5 // pred_region
        %s249 = ssub.s32 %s17, 1
        // Predicated region
        $region13: #{enetv2_forward.3} parent=11 // pred_check
          %p250 = pneg %p104
        $region14: #{enetv2_forward.3} parent=11 // pred_check_branch
          %252 = sbr.rel (%p250) target = $region16
        $region15: #{enetv2_forward.3} parent=11 // pred_region
          _
        $region16: #{enetv2_forward.3} parent=11 // pred_fallthru
          _
        // Predicated region
        $region17: #{enetv2_forward.3} parent=11 // pred_check
          %p253 = pneg %p125
        $region18: #{enetv2_forward.3} parent=11 // pred_check_branch
          %255 = sbr.rel (%p253) target = $region20
        $region19: #{enetv2_forward.3} parent=11 // pred_region
          _
        $region20: #{enetv2_forward.3} parent=11 // pred_fallthru
          _
        // Predicated region
        $region21: #{enetv2_forward.3} parent=11 // pred_check
          %p256 = pneg %p146
        $region22: #{enetv2_forward.3} parent=11 // pred_check_branch
          %258 = sbr.rel (%p256) target = $region24
        $region23: #{enetv2_forward.3} parent=11 // pred_region
          _
        $region24: #{enetv2_forward.3} parent=11 // pred_fallthru
          _
        // Predicated region
        $region25: #{enetv2_forward.3} parent=11 // pred_check
          %p259 = pneg %p167
        $region26: #{enetv2_forward.3} parent=11 // pred_check_branch
          %261 = sbr.rel (%p259) target = $region28
        $region27: #{enetv2_forward.3} parent=11 // pred_region
          _
        $region28: #{enetv2_forward.3} parent=11 // pred_fallthru
          _
        // Predicated region
        $region29: #{enetv2_forward.3} parent=11 // pred_check
          %p262 = pneg %p188
        $region30: #{enetv2_forward.3} parent=11 // pred_check_branch
          %264 = sbr.rel (%p262) target = $region32
        $region31: #{enetv2_forward.3} parent=11 // pred_region
          _
        $region32: #{enetv2_forward.3} parent=11 // pred_fallthru
          _
        // Predicated region
        $region33: #{enetv2_forward.3} parent=11 // pred_check
          %p265 = pneg %p209
        $region34: #{enetv2_forward.3} parent=11 // pred_check_branch
          %267 = sbr.rel (%p265) target = $region36
        $region35: #{enetv2_forward.3} parent=11 // pred_region
          _
        $region36: #{enetv2_forward.3} parent=11 // pred_fallthru
          _
      $region12: #{enetv2_forward.3} parent=5 // pred_fallthru
        _
      %p268 = scmp.lt.s32.totalorder %s17, 2
      // Predicated region
      $region37: #{enetv2_forward.3} parent=5 // pred_check
        %p269 = pneg %p268
      $region38: #{enetv2_forward.3} parent=5 // pred_check_branch
        %271 = sbr.rel (%p269) target = $region40
      $region39: #{enetv2_forward.3} parent=5 // pred_region
        // Predicated region
        $region41: #{enetv2_forward.3} parent=39 // pred_check
          %p272 = pneg %p51
        $region42: #{enetv2_forward.3} parent=39 // pred_check_branch
          %274 = sbr.rel (%p272) target = $region44
        $region43: #{enetv2_forward.3} parent=39 // pred_region
          %s275 = smul.u32 8, %s25
          %p276 = scmp.lt.s32.totalorder %s24, 1
          %s277 = scalar_select %p276, %s24, 1
          %p278 = scmp.lt.s32.totalorder %s275, 7
          %s279 = scalar_select %p278, %s275, 7
          %s280 = smul.addr %s277, 8
          %s281 = sadd.s32 %s279, %s280
          %s282 = smul.addr %s281, 4
          %s283 = scalar_lea.vmem %s0, %s282
          %s284 = smul.u32 8, %s25
        $region44: #{enetv2_forward.3} parent=39 // pred_fallthru
          _
        // Predicated region
        $region45: #{enetv2_forward.3} parent=39 // pred_check
          %p285 = pneg %p77
        $region46: #{enetv2_forward.3} parent=39 // pred_check_branch
          %287 = sbr.rel (%p285) target = $region48
        $region47: #{enetv2_forward.3} parent=39 // pred_region
          %p288 = scmp.lt.s32.totalorder %s24, 1
          %s289 = scalar_select %p288, %s24, 1
          %s290 = scalar_lea.vmem %s1, %s289
        $region48: #{enetv2_forward.3} parent=39 // pred_fallthru
          _
      $region40: #{enetv2_forward.3} parent=5 // pred_fallthru
        _
      %p291 = scmp.le.s32.totalorder 1, %s17
      %p292 = scmp.lt.s32.totalorder %s17, 3
      %p293 = pnand %p291, %p292
      %p294 = pneg %p293
      // Predicated region
      $region49: #{enetv2_forward.3} parent=5 // pred_check
        _
      $region50: #{enetv2_forward.3} parent=5 // pred_check_branch
        %296 = sbr.rel (%p293) target = $region52
      $region51: #{enetv2_forward.3} parent=5 // pred_region
        %s297 = ssub.s32 %s17, 1
        %s298 = smul.u32 8, %s27
        %p299 = scmp.lt.s32.totalorder %s26, 1
        %s300 = scalar_select %p299, %s26, 1
        %p301 = scmp.lt.s32.totalorder %s298, 7
        %s302 = scalar_select %p301, %s298, 7
        %s303 = smul.addr %s300, 8
        %s304 = sadd.s32 %s302, %s303
        %s305 = smul.addr %s304, 4
        %s306 = scalar_lea.vmem %s0, %s305
        %p307 = pneg %p57
        %p308 = pneg %p54
        %p309 = scmp.lt.s32.totalorder %s26, 1
        %s310 = scalar_select %p309, %s26, 1
        %s311 = scalar_lea.vmem %s1, %s310
        %p312 = pneg %p83
        %p313 = pneg %p80
        %p314 = pneg %p104
        %p315 = pneg %p101
        %p316 = pneg %p125
        %p317 = pneg %p122
        %p318 = pneg %p146
        %p319 = pneg %p143
        %p320 = pneg %p167
        %p321 = pneg %p164
        %p322 = pneg %p188
        %p323 = pneg %p185
        %p324 = pneg %p209
        %p325 = pneg %p206
        %p326 = pneg %p235
        %p327 = pneg %p232
        %s328 = sand.u32 %s222, 1
        %s329 = scalar_lea.sflag [#allocation4], %s328
        %s330 = sand.u32 %s222, 1
        %s331 = scalar_lea.vmem [#allocation3], %s330
        %s332 = smul.u32 8, %s27
        %p333 = scmp.lt.s32.totalorder %s26, 1
        %s334 = scalar_select %p333, %s26, 1
        %p335 = scmp.lt.s32.totalorder %s332, 7
        %s336 = scalar_select %p335, %s332, 7
        %s337 = smul.addr %s334, 8
        %s338 = sadd.s32 %s336, %s337
        %s339 = smul.addr %s338, 4
        %s340 = scalar_lea.vmem %s0, %s339
        %s341 = smul.u32 8, %s27
        %p342 = scmp.lt.s32.totalorder %s26, 1
        %s343 = scalar_select %p342, %s26, 1
        %s344 = scalar_lea.vmem %s1, %s343
        %p346 = scmp.eq.s32.totalorder %s27, 0
        // Predicated region
        $region53: #{enetv2_forward.3} parent=51 // pred_check
          %p347 = pneg %p346
        $region54: #{enetv2_forward.3} parent=51 // pred_check_branch
          %349 = sbr.rel (%p347) target = $region56
        $region55: #{enetv2_forward.3} parent=51 // pred_region
          %350 = vst [vmem:[#allocation2] sm:$0x1] 0.0
        $region56: #{enetv2_forward.3} parent=51 // pred_fallthru
          _
        %v351 = vld [vmem:[%s340] sm:$0xf]
        %v352 = vld [vmem:[%s340 + $0x4] sm:$0xf]
        %v353 = vld [vmem:[%s340 + $0x8] sm:$0xf]
        %v354 = vld [vmem:[%s340 + $0xc] sm:$0xf]
        %v355 = vld [vmem:[%s340 + $0x10] sm:$0xf]
        %v356 = vld [vmem:[%s340 + $0x14] sm:$0xf]
        %v357 = vld [vmem:[%s340 + $0x18] sm:$0xf]
        %v358 = vld [vmem:[%s340 + $0x1c] sm:$0xf]
        %v359 = vunpack.c.l.bf16 %v351
        %v360 = vunpack.c.l.bf16 %v352
        %v361 = vunpack.c.l.bf16 %v353
        %v362 = vunpack.c.l.bf16 %v354
        %v363 = vunpack.c.l.bf16 %v355
        %v364 = vunpack.c.l.bf16 %v356
        %v365 = vunpack.c.l.bf16 %v357
        %v366 = vunpack.c.l.bf16 %v358
        %v367 = vld [vmem:[%s344] sm:$0x1]
        %v369 = vlaneseq
        %v370 = vshrl.u32 %v369, 7
        %v371 = vsub.s32 0, %v370
        %v372 = vrot.slane %v367, %v371
        %v374 = vmul.f32 %v359, %v372
        %v375 = vmul.f32 %v360, %v372
        %v376 = vmul.f32 %v361, %v372
        %v377 = vmul.f32 %v362, %v372
        %v378 = vmul.f32 %v363, %v372
        %v379 = vmul.f32 %v364, %v372
        %v380 = vmul.f32 %v365, %v372
        %v381 = vmul.f32 %v366, %v372
        %v382 = vpack.c.bf16 %v375, %v374
        %v383 = vpack.c.bf16 %v377, %v376
        %v384 = vpack.c.bf16 %v379, %v378
        %v385 = vpack.c.bf16 %v381, %v380
        %v386 = vld [vmem:[%s2] sm:$0xf]
        %v387 = vld [vmem:[%s2 + $0x4] sm:$0xf]
        %v388 = vld [vmem:[%s2 + $0x8] sm:$0xf]
        %v389 = vld [vmem:[%s2 + $0xc] sm:$0xf]
        %v390 = vld [vmem:[%s2 + $0x10] sm:$0xf]
        %v391 = vld [vmem:[%s2 + $0x14] sm:$0xf]
        %v392 = vld [vmem:[%s2 + $0x18] sm:$0xf]
        %v393 = vld [vmem:[%s2 + $0x1c] sm:$0xf]
        %v394 = vld [vmem:[%s2 + $0x20] sm:$0xf]
        %v395 = vld [vmem:[%s2 + $0x24] sm:$0xf]
        %v396 = vld [vmem:[%s2 + $0x28] sm:$0xf]
        %v397 = vld [vmem:[%s2 + $0x2c] sm:$0xf]
        %v398 = vld [vmem:[%s2 + $0x30] sm:$0xf]
        %v399 = vld [vmem:[%s2 + $0x34] sm:$0xf]
        %v400 = vld [vmem:[%s2 + $0x38] sm:$0xf]
        %v401 = vld [vmem:[%s2 + $0x3c] sm:$0xf]
        %v402 = vld [vmem:[%s3] sm:$0x1]
        %v404 = vlaneseq
        %v405 = vshrl.u32 %v404, 7
        %v406 = vsub.s32 0, %v405
        %v407 = vrot.slane %v402, %v406
        %v425 = vunpack.c.l.b16 %v386
        %v426 = vunpack.c.l.b16 %v387
        %v427 = vunpack.c.l.b16 %v388
        %v428 = vunpack.c.l.b16 %v389
        %v429 = vunpack.c.l.b16 %v390
        %v430 = vunpack.c.l.b16 %v391
        %v431 = vunpack.c.l.b16 %v392
        %v432 = vunpack.c.l.b16 %v393
        %v433 = vunpack.c.l.b16 %v394
        %v434 = vunpack.c.l.b16 %v395
        %v435 = vunpack.c.l.b16 %v396
        %v436 = vunpack.c.l.b16 %v397
        %v437 = vunpack.c.l.b16 %v398
        %v438 = vunpack.c.l.b16 %v399
        %v439 = vunpack.c.l.b16 %v400
        %v440 = vunpack.c.l.b16 %v401
        %v441 = vpack.c.b16 %v426, %v425
        %v442 = vpack.c.b16 %v428, %v427
        %v443 = vpack.c.b16 %v430, %v429
        %v444 = vpack.c.b16 %v432, %v431
        %v445 = vpack.c.b16 %v434, %v433
        %v446 = vpack.c.b16 %v436, %v435
        %v447 = vpack.c.b16 %v438, %v437
        %v448 = vpack.c.b16 %v440, %v439
        %457 = vmatprep.subr.bf16.mxu0 0
        %458 = vmatpush1.bf16.msra.mxu0 %v441
        %459 = vmatprep.subr.bf16.mxu0 0
        %460 = vmatpush1.bf16.msra.mxu0 %v442
        %461 = vmatprep.subr.bf16.mxu0 0
        %462 = vmatpush1.bf16.msra.mxu0 %v443
        %463 = vmatprep.subr.bf16.mxu0 0
        %464 = vmatpush1.bf16.msra.mxu0 %v444
        %465 = vmatprep.subr.bf16.mxu0 0
        %466 = vmatpush1.bf16.msra.mxu0 %v445
        %467 = vmatprep.subr.bf16.mxu0 0
        %468 = vmatpush1.bf16.msra.mxu0 %v446
        %469 = vmatprep.subr.bf16.mxu0 0
        %470 = vmatpush1.bf16.msra.mxu0 %v447
        %471 = vmatprep.subr.bf16.mxu0 0
        %472 = vmatpush1.bf16.msra.mxu0 %v448
        %473 = vmatprep.subr.bf16.mxu0 0
        %474 = vmatpush1.bf16.msra.mxu0 0
        %475 = vmatprep.subr.bf16.mxu0 0
        %476 = vmatpush1.bf16.msra.mxu0 0
        %477 = vmatprep.subr.bf16.mxu0 0
        %478 = vmatpush1.bf16.msra.mxu0 0
        %479 = vmatprep.subr.bf16.mxu0 0
        %480 = vmatpush1.bf16.msra.mxu0 0
        %481 = vmatprep.subr.bf16.mxu0 0
        %482 = vmatpush1.bf16.msra.mxu0 0
        %483 = vmatprep.subr.bf16.mxu0 0
        %484 = vmatpush1.bf16.msra.mxu0 0
        %485 = vmatprep.subr.bf16.mxu0 0
        %486 = vmatpush1.bf16.msra.mxu0 0
        %487 = vmatprep.subr.bf16.mxu0 0
        %488 = vmatpush1.bf16.msra.mxu0 0
        %489 = vmatprep.mubr.bf16.mxu0 0
        %490 = vmatmul.mubr.bf16.gmra.mrb[0].mxu0 %v382
        %v491 = vpop.f32.mrb[0].mxu0
        %v492 = vadd.f32 %v407, %v491
        %v493 = vpop.f32.mrb[0].mxu0
        %v494 = vpop.f32.mrb[0].mxu0
        %v495 = vadd.f32 %v407, %v494
        %v496 = vpop.f32.mrb[0].mxu0
        %497 = vmatprep.mubr.bf16.mxu0 0
        %498 = vmatmul.mubr.bf16.gmra.mrb[0].mxu0 %v383
        %v499 = vpop.f32.mrb[0].mxu0
        %v500 = vadd.f32 %v407, %v499
        %v501 = vpop.f32.mrb[0].mxu0
        %v502 = vpop.f32.mrb[0].mxu0
        %v503 = vadd.f32 %v407, %v502
        %v504 = vpop.f32.mrb[0].mxu0
        %505 = vmatprep.mubr.bf16.mxu0 0
        %506 = vmatmul.mubr.bf16.gmra.mrb[0].mxu0 %v384
        %v507 = vpop.f32.mrb[0].mxu0
        %v508 = vadd.f32 %v407, %v507
        %v509 = vpop.f32.mrb[0].mxu0
        %v510 = vpop.f32.mrb[0].mxu0
        %v511 = vadd.f32 %v407, %v510
        %v512 = vpop.f32.mrb[0].mxu0
        %513 = vmatprep.mubr.bf16.mxu0 0
        %514 = vmatmul.mubr.bf16.gmra.mrb[0].mxu0 %v385
        %v515 = vpop.f32.mrb[0].mxu0
        %v516 = vadd.f32 %v407, %v515
        %v517 = vpop.f32.mrb[0].mxu0
        %v518 = vpop.f32.mrb[0].mxu0
        %v519 = vadd.f32 %v407, %v518
        %v520 = vpop.f32.mrb[0].mxu0
        %521 = vdwg.mxu0
        %v522 = vpack.c.bf16 %v495, %v492
        %v523 = vpack.c.bf16 %v503, %v500
        %v524 = vpack.c.bf16 %v511, %v508
        %v525 = vpack.c.bf16 %v519, %v516
        %v526 = vld [vmem:[%s4] sm:$0xf]
        %v527 = vld [vmem:[%s4 + $0x4] sm:$0xf]
        %v528 = vld [vmem:[%s4 + $0x8] sm:$0xf]
        %v529 = vld [vmem:[%s4 + $0xc] sm:$0xf]
        %v530 = vld [vmem:[%s4 + $0x10] sm:$0xf]
        %v531 = vld [vmem:[%s4 + $0x14] sm:$0xf]
        %v532 = vld [vmem:[%s4 + $0x18] sm:$0xf]
        %v533 = vld [vmem:[%s4 + $0x1c] sm:$0xf]
        %v534 = vld [vmem:[%s4 + $0x20] sm:$0xf]
        %v535 = vld [vmem:[%s4 + $0x24] sm:$0xf]
        %v536 = vld [vmem:[%s4 + $0x28] sm:$0xf]
        %v537 = vld [vmem:[%s4 + $0x2c] sm:$0xf]
        %v538 = vld [vmem:[%s4 + $0x30] sm:$0xf]
        %v539 = vld [vmem:[%s4 + $0x34] sm:$0xf]
        %v540 = vld [vmem:[%s4 + $0x38] sm:$0xf]
        %v541 = vld [vmem:[%s4 + $0x3c] sm:$0xf]
        %v542 = vld [vmem:[%s5] sm:$0x1]
        %v544 = vlaneseq
        %v545 = vshrl.u32 %v544, 7
        %v546 = vsub.s32 0, %v545
        %v547 = vrot.slane %v542, %v546
        %v565 = vunpack.c.l.b16 %v526
        %v566 = vunpack.c.l.b16 %v527
        %v567 = vunpack.c.l.b16 %v528
        %v568 = vunpack.c.l.b16 %v529
        %v569 = vunpack.c.l.b16 %v530
        %v570 = vunpack.c.l.b16 %v531
        %v571 = vunpack.c.l.b16 %v532
        %v572 = vunpack.c.l.b16 %v533
        %v573 = vunpack.c.l.b16 %v534
        %v574 = vunpack.c.l.b16 %v535
        %v575 = vunpack.c.l.b16 %v536
        %v576 = vunpack.c.l.b16 %v537
        %v577 = vunpack.c.l.b16 %v538
        %v578 = vunpack.c.l.b16 %v539
        %v579 = vunpack.c.l.b16 %v540
        %v580 = vunpack.c.l.b16 %v541
        %v581 = vpack.c.b16 %v566, %v565
        %v582 = vpack.c.b16 %v568, %v567
        %v583 = vpack.c.b16 %v570, %v569
        %v584 = vpack.c.b16 %v572, %v571
        %v585 = vpack.c.b16 %v574, %v573
        %v586 = vpack.c.b16 %v576, %v575
        %v587 = vpack.c.b16 %v578, %v577
        %v588 = vpack.c.b16 %v580, %v579
        %597 = vmatprep.subr.bf16.mxu0 0
        %598 = vmatpush1.bf16.msra.mxu0 %v581
        %599 = vmatprep.subr.bf16.mxu0 0
        %600 = vmatpush1.bf16.msra.mxu0 %v582
        %601 = vmatprep.subr.bf16.mxu0 0
        %602 = vmatpush1.bf16.msra.mxu0 %v583
        %603 = vmatprep.subr.bf16.mxu0 0
        %604 = vmatpush1.bf16.msra.mxu0 %v584
        %605 = vmatprep.subr.bf16.mxu0 0
        %606 = vmatpush1.bf16.msra.mxu0 %v585
        %607 = vmatprep.subr.bf16.mxu0 0
        %608 = vmatpush1.bf16.msra.mxu0 %v586
        %609 = vmatprep.subr.bf16.mxu0 0
        %610 = vmatpush1.bf16.msra.mxu0 %v587
        %611 = vmatprep.subr.bf16.mxu0 0
        %612 = vmatpush1.bf16.msra.mxu0 %v588
        %613 = vmatprep.subr.bf16.mxu0 0
        %614 = vmatpush1.bf16.msra.mxu0 0
        %615 = vmatprep.subr.bf16.mxu0 0
        %616 = vmatpush1.bf16.msra.mxu0 0
        %617 = vmatprep.subr.bf16.mxu0 0
        %618 = vmatpush1.bf16.msra.mxu0 0
        %619 = vmatprep.subr.bf16.mxu0 0
        %620 = vmatpush1.bf16.msra.mxu0 0
        %621 = vmatprep.subr.bf16.mxu0 0
        %622 = vmatpush1.bf16.msra.mxu0 0
        %623 = vmatprep.subr.bf16.mxu0 0
        %624 = vmatpush1.bf16.msra.mxu0 0
        %625 = vmatprep.subr.bf16.mxu0 0
        %626 = vmatpush1.bf16.msra.mxu0 0
        %627 = vmatprep.subr.bf16.mxu0 0
        %628 = vmatpush1.bf16.msra.mxu0 0
        %629 = vmatprep.mubr.bf16.mxu0 0
        %630 = vmatmul.mubr.bf16.gmra.mrb[0].mxu0 %v522
        %v631 = vpop.f32.mrb[0].mxu0
        %v632 = vadd.f32 %v547, %v631
        %v633 = vpop.f32.mrb[0].mxu0
        %v634 = vpop.f32.mrb[0].mxu0
        %v635 = vadd.f32 %v547, %v634
        %v636 = vpop.f32.mrb[0].mxu0
        %637 = vmatprep.mubr.bf16.mxu0 0
        %638 = vmatmul.mubr.bf16.gmra.mrb[0].mxu0 %v523
        %v639 = vpop.f32.mrb[0].mxu0
        %v640 = vadd.f32 %v547, %v639
        %v641 = vpop.f32.mrb[0].mxu0
        %v642 = vpop.f32.mrb[0].mxu0
        %v643 = vadd.f32 %v547, %v642
        %v644 = vpop.f32.mrb[0].mxu0
        %645 = vmatprep.mubr.bf16.mxu0 0
        %646 = vmatmul.mubr.bf16.gmra.mrb[0].mxu0 %v524
        %v647 = vpop.f32.mrb[0].mxu0
        %v648 = vadd.f32 %v547, %v647
        %v649 = vpop.f32.mrb[0].mxu0
        %v650 = vpop.f32.mrb[0].mxu0
        %v651 = vadd.f32 %v547, %v650
        %v652 = vpop.f32.mrb[0].mxu0
        %653 = vmatprep.mubr.bf16.mxu0 0
        %654 = vmatmul.mubr.bf16.gmra.mrb[0].mxu0 %v525
        %v655 = vpop.f32.mrb[0].mxu0
        %v656 = vadd.f32 %v547, %v655
        %v657 = vpop.f32.mrb[0].mxu0
        %v658 = vpop.f32.mrb[0].mxu0
        %v659 = vadd.f32 %v547, %v658
        %v660 = vpop.f32.mrb[0].mxu0
        %661 = vdwg.mxu0
        %v662 = vxor.u32 %v632, 2147483648
        %v663 = vxor.u32 %v635, 2147483648
        %v664 = vxor.u32 %v640, 2147483648
        %v665 = vxor.u32 %v643, 2147483648
        %v666 = vxor.u32 %v648, 2147483648
        %v667 = vxor.u32 %v651, 2147483648
        %v668 = vxor.u32 %v656, 2147483648
        %v669 = vxor.u32 %v659, 2147483648
        %v670 = vmul.f32 %v662, 1.442695
        %v671 = vpow.pop %v670
        %v672 = vmul.f32 %v663, 1.442695
        %v673 = vpow.pop %v672
        %v674 = vmul.f32 %v664, 1.442695
        %v675 = vpow.pop %v674
        %v676 = vmul.f32 %v665, 1.442695
        %v677 = vpow.pop %v676
        %v678 = vmul.f32 %v666, 1.442695
        %v679 = vpow.pop %v678
        %v680 = vmul.f32 %v667, 1.442695
        %v681 = vpow.pop %v680
        %v682 = vmul.f32 %v668, 1.442695
        %v683 = vpow.pop %v682
        %v684 = vmul.f32 %v669, 1.442695
        %v685 = vpow.pop %v684
        %v686 = vadd.f32 %v671, 1.0
        %v687 = vadd.f32 %v673, 1.0
        %v688 = vadd.f32 %v675, 1.0
        %v689 = vadd.f32 %v677, 1.0
        %v690 = vadd.f32 %v679, 1.0
        %v691 = vadd.f32 %v681, 1.0
        %v692 = vadd.f32 %v683, 1.0
        %v693 = vadd.f32 %v685, 1.0
        %v694 = vrcp.pop %v686
        %v695 = vmul.f32 1.0, %v694
        %v696 = vrcp.pop %v687
        %v697 = vmul.f32 1.0, %v696
        %v698 = vrcp.pop %v688
        %v699 = vmul.f32 1.0, %v698
        %v700 = vrcp.pop %v689
        %v701 = vmul.f32 1.0, %v700
        %v702 = vrcp.pop %v690
        %v703 = vmul.f32 1.0, %v702
        %v704 = vrcp.pop %v691
        %v705 = vmul.f32 1.0, %v704
        %v706 = vrcp.pop %v692
        %v707 = vmul.f32 1.0, %v706
        %v708 = vrcp.pop %v693
        %v709 = vmul.f32 1.0, %v708
        %v710 = vmul.f32 %v632, %v695
        %v711 = vmul.f32 %v635, %v697
        %v712 = vmul.f32 %v640, %v699
        %v713 = vmul.f32 %v643, %v701
        %v714 = vmul.f32 %v648, %v703
        %v715 = vmul.f32 %v651, %v705
        %v716 = vmul.f32 %v656, %v707
        %v717 = vmul.f32 %v659, %v709
        %v718 = vld [vmem:[#allocation2] sm:$0x1]
        %v719 = vadd.f32 %v710, %v711
        %v720 = vadd.f32 %v719, %v712
        %v721 = vadd.f32 %v720, %v713
        %v722 = vadd.f32 %v721, %v714
        %v723 = vadd.f32 %v722, %v715
        %v724 = vadd.f32 %v723, %v716
        %v725 = vadd.f32 %v724, %v717
        %v726 = vrot.slane %v725, 4
        %v727 = vadd.f32 %v725, %v726
        %v728 = vrot.slane %v727, 2
        %v729 = vadd.f32 %v727, %v728
        %v730 = vrot.slane %v729, 1
        %v731 = vadd.f32 %v729, %v730
        %v732 = vadd.f32 %v718, %v731
        %733 = vst [vmem:[#allocation2] sm:$0x1] %v732
        // Predicated region
        $region57: #{enetv2_forward.3} parent=51 // pred_check
          %p734 = pneg %p346
        $region58: #{enetv2_forward.3} parent=51 // pred_check_branch
          %736 = sbr.rel (%p734) target = $region60
        $region59: #{enetv2_forward.3} parent=51 // pred_region
          %v737 = vld [vmem:[#allocation2] sm:$0x1]
          %v738 = vmul.f32 %v737, 0.015625
          %v739 = vpack.c.bf16 %v738, %v738
          %v740 = vld [vmem:[%s6] sm:$0xf]
          %v741 = vld [vmem:[%s6 + $0x4] sm:$0xf]
          %v742 = vld [vmem:[%s6 + $0x8] sm:$0xf]
          %v743 = vld [vmem:[%s6 + $0xc] sm:$0xf]
          %v744 = vld [vmem:[%s6 + $0x10] sm:$0xf]
          %v745 = vld [vmem:[%s6 + $0x14] sm:$0xf]
          %v746 = vld [vmem:[%s6 + $0x18] sm:$0xf]
          %v747 = vld [vmem:[%s6 + $0x1c] sm:$0xf]
          %v748 = vld [vmem:[%s6 + $0x20] sm:$0xf]
          %v749 = vld [vmem:[%s6 + $0x24] sm:$0xf]
          %v750 = vld [vmem:[%s6 + $0x28] sm:$0xf]
          %v751 = vld [vmem:[%s6 + $0x2c] sm:$0xf]
          %v752 = vld [vmem:[%s6 + $0x30] sm:$0xf]
          %v753 = vld [vmem:[%s6 + $0x34] sm:$0xf]
          %v754 = vld [vmem:[%s6 + $0x38] sm:$0xf]
          %v755 = vld [vmem:[%s6 + $0x3c] sm:$0xf]
          %v756 = vld [vmem:[%s7] sm:$0x1]
          %v773 = vunpack.c.l.b16 %v740
          %v774 = vunpack.c.l.b16 %v741
          %v775 = vunpack.c.l.b16 %v742
          %v776 = vunpack.c.l.b16 %v743
          %v777 = vunpack.c.l.b16 %v744
          %v778 = vunpack.c.l.b16 %v745
          %v779 = vunpack.c.l.b16 %v746
          %v780 = vunpack.c.l.b16 %v747
          %v781 = vunpack.c.l.b16 %v748
          %v782 = vunpack.c.l.b16 %v749
          %v783 = vunpack.c.l.b16 %v750
          %v784 = vunpack.c.l.b16 %v751
          %v785 = vunpack.c.l.b16 %v752
          %v786 = vunpack.c.l.b16 %v753
          %v787 = vunpack.c.l.b16 %v754
          %v788 = vunpack.c.l.b16 %v755
          %v789 = vpack.c.b16 %v774, %v773
          %v790 = vpack.c.b16 %v776, %v775
          %v791 = vpack.c.b16 %v778, %v777
          %v792 = vpack.c.b16 %v780, %v779
          %v793 = vpack.c.b16 %v782, %v781
          %v794 = vpack.c.b16 %v784, %v783
          %v795 = vpack.c.b16 %v786, %v785
          %v796 = vpack.c.b16 %v788, %v787
          %805 = vmatprep.subr.bf16.mxu0 0
          %806 = vmatpush1.bf16.msra.mxu0 %v789
          %807 = vmatprep.subr.bf16.mxu0 0
          %808 = vmatpush1.bf16.msra.mxu0 %v790
          %809 = vmatprep.subr.bf16.mxu0 0
          %810 = vmatpush1.bf16.msra.mxu0 %v791
          %811 = vmatprep.subr.bf16.mxu0 0
          %812 = vmatpush1.bf16.msra.mxu0 %v792
          %813 = vmatprep.subr.bf16.mxu0 0
          %814 = vmatpush1.bf16.msra.mxu0 %v793
          %815 = vmatprep.subr.bf16.mxu0 0
          %816 = vmatpush1.bf16.msra.mxu0 %v794
          %817 = vmatprep.subr.bf16.mxu0 0
          %818 = vmatpush1.bf16.msra.mxu0 %v795
          %819 = vmatprep.subr.bf16.mxu0 0
          %820 = vmatpush1.bf16.msra.mxu0 %v796
          %821 = vmatprep.subr.bf16.mxu0 0
          %822 = vmatpush1.bf16.msra.mxu0 0
          %823 = vmatprep.subr.bf16.mxu0 0
          %824 = vmatpush1.bf16.msra.mxu0 0
          %825 = vmatprep.subr.bf16.mxu0 0
          %826 = vmatpush1.bf16.msra.mxu0 0
          %827 = vmatprep.subr.bf16.mxu0 0
          %828 = vmatpush1.bf16.msra.mxu0 0
          %829 = vmatprep.subr.bf16.mxu0 0
          %830 = vmatpush1.bf16.msra.mxu0 0
          %831 = vmatprep.subr.bf16.mxu0 0
          %832 = vmatpush1.bf16.msra.mxu0 0
          %833 = vmatprep.subr.bf16.mxu0 0
          %834 = vmatpush1.bf16.msra.mxu0 0
          %835 = vmatprep.subr.bf16.mxu0 0
          %836 = vmatpush1.bf16.msra.mxu0 0
          %837 = vmatprep.mubr.bf16.mxu0 0
          %838 = vmatmul.mubr.bf16.gmra.mrb[0].mxu0 %v739
          %v839 = vpop.f32.mrb[0].mxu0
          %v840 = vadd.f32 %v756, %v839
          %v841 = vpop.f32.mrb[0].mxu0
          %v842 = vpop.f32.mrb[0].mxu0
          %v843 = vpop.f32.mrb[0].mxu0
          %844 = vdwg.mxu0
          %845 = vst [vmem:[%s331] sm:$0x1] %v840
        $region60: #{enetv2_forward.3} parent=51 // pred_fallthru
          _
        %s846 = sand.u32 %s222, 1
        %s847 = scalar_lea.sflag [#allocation4], %s846
        %s848 = sand.u32 %s222, 1
        %s849 = scalar_lea.vmem [#allocation3], %s848
        // Predicated region
        $region61: #{enetv2_forward.3} parent=51 // pred_check
          %p850 = pneg %p232
        $region62: #{enetv2_forward.3} parent=51 // pred_check_branch
          %852 = sbr.rel (%p850) target = $region64
        $region63: #{enetv2_forward.3} parent=51 // pred_region
          %s854 = ssub.s32 16, 16
          %855 = vsyncadd %s847, %s854
          %s856 = smul.addr %s26, 16
          %s857 = scalar_lea.hbm %s8, %s856
          %s859 = sshll.u32 %s849, 4
          %s860 = int_to_ptr.vmem [resolvable:$true] %s859
          %862 = dma.vmem_to_hbm [thread:$0]  %s860, 16, %s857, %s847
        $region64: #{enetv2_forward.3} parent=51 // pred_fallthru
          _
      $region52: #{enetv2_forward.3} parent=5 // pred_fallthru
        _
      %p863 = scmp.le.s32.totalorder 2, %s17
      // Predicated region
      $region65: #{enetv2_forward.3} parent=5 // pred_check
        %p864 = pneg %p863
      $region66: #{enetv2_forward.3} parent=5 // pred_check_branch
        %866 = sbr.rel (%p864) target = $region68
      $region67: #{enetv2_forward.3} parent=5 // pred_region
        %s867 = ssub.s32 %s17, 2
        // Predicated region
        $region69: #{enetv2_forward.3} parent=67 // pred_check
          %p868 = pneg %p238
        $region70: #{enetv2_forward.3} parent=67 // pred_check_branch
          %870 = sbr.rel (%p868) target = $region72
        $region71: #{enetv2_forward.3} parent=67 // pred_region
          %s871 = sand.u32 %s223, 1
          %s872 = scalar_lea.sflag [#allocation4], %s871
          %s873 = sand.u32 %s223, 1
          %s874 = scalar_lea.vmem [#allocation3], %s873
          %875 = dma.done %s872, 16
        $region72: #{enetv2_forward.3} parent=67 // pred_fallthru
          _
      $region68: #{enetv2_forward.3} parent=5 // pred_fallthru
        _
    $region6: #{enetv2_forward.3} parent=1 // loop_footer
      %s21 = sadd.s32 1, %s17
    $region7: #{enetv2_forward.3} parent=1 // loop_footer_branch
      %16 = sbr.rel target = $region3
    $region8: #{enetv2_forward.3} parent=1 // loop_exit
      _
    %876 = vsyncpa [#allocation4], 1
    %s877 = scalar_lea.sflag [#allocation4], 1
    %878 = vsyncpa %s877, 1

// kernel: enetv2_forward.2
$region0: #{enetv2_forward.2}
  #allocation0 [shape = 'u32[]', space=smem, size = 0x4, offset = 0x4, fixed_abs, tag = 'smem constant byte address 0x4 - core index']
  #allocation1 [shape = 'u32[144,128]{1,0:T(1,128)}', space=vmem, size = 0x12000, scoped, tag = 'internal scratch']
  %s0 = inlined_call_operand.vmem [shape: bf16[2,64,27], index: 0, kind: input, shape index: {}]
  %s1 = inlined_call_operand.vmem [shape: bf16[27,128], index: 1, kind: input, shape index: {}]
  %s2 = inlined_call_operand.vmem [shape: f32[1,128], index: 2, kind: input, shape index: {}]
  %s3 = inlined_call_operand.vmem [shape: bf16[128,128], index: 3, kind: input, shape index: {}]
  %s4 = inlined_call_operand.vmem [shape: f32[1,128], index: 4, kind: input, shape index: {}]
  %s5 = inlined_call_operand.vmem [shape: f32[9,128], index: 5, kind: input, shape index: {}]
  %s6 = inlined_call_operand.vmem [shape: f32[1,128], index: 6, kind: input, shape index: {}]
  %s7 = inlined_call_operand.vmem [shape: f32[128,128], index: 7, kind: input, shape index: {}]
  %s8 = inlined_call_operand.vmem [shape: f32[1,128], index: 8, kind: input, shape index: {}]
  %s9 = inlined_call_operand.vmem [shape: f32[128,128], index: 9, kind: input, shape index: {}]
  %s10 = inlined_call_operand.vmem [shape: f32[1,128], index: 10, kind: input, shape index: {}]
  %s11 = inlined_call_operand.vmem [shape: bf16[2,64,128], index: 11, kind: output, shape index: {0}]
  %s12 = inlined_call_operand.vmem [shape: f32[2,1,128], index: 12, kind: output, shape index: {1}]
  %13 = xla_tuple %s11, %s12
  %s14 = sld [smem:[#allocation0]]
  $region85: #{enetv2_forward.2} parent=0
    _
  %s16 = ssub.s32 1, %s14
  %s17 = scalar_select 0, %s16, %s14
  loop: start=0, step=1, limit=4
  $region2: #{enetv2_forward.2} parent=0 // loop_pre_header
    _
  $region3: #{enetv2_forward.2} parent=0 // loop_header
    %s19 = sphi 0, %s23
    %p20 = scmp.ge.s32.totalorder %s19, 4
    %s29 = sphi 0, %s31
    %s32 = sphi 0, %s29
    %s33 = sphi 0, %s32
    %s49 = sphi 0, %s33
    %s53 = sphi 0, %s53
    %s55 = sphi 0, %s53
    %s56 = sphi 0, %s55
    %s70 = sphi 0, %s56
    %s74 = sphi 0, %s74
    %s76 = sphi 0, %s74
    %s77 = sphi 0, %s76
    %s91 = sphi 0, %s77
    %s95 = sphi 0, %s95
    %s97 = sphi 0, %s95
    %s98 = sphi 0, %s97
    %s112 = sphi 0, %s98
    %s116 = sphi 0, %s116
    %s118 = sphi 0, %s116
    %s119 = sphi 0, %s118
    %s133 = sphi 0, %s119
    %s137 = sphi 0, %s137
    %s139 = sphi 0, %s137
    %s140 = sphi 0, %s139
    %s154 = sphi 0, %s140
    %s158 = sphi 0, %s158
    %s160 = sphi 0, %s158
    %s161 = sphi 0, %s160
    %s175 = sphi 0, %s161
    %s179 = sphi 0, %s179
    %s181 = sphi 0, %s179
    %s182 = sphi 0, %s181
    %s196 = sphi 0, %s182
    %s200 = sphi 0, %s200
    %s202 = sphi 0, %s200
    %s203 = sphi 0, %s202
    %s217 = sphi 0, %s203
    %s221 = sphi 0, %s221
    %s223 = sphi 0, %s221
    %s224 = sphi 0, %s223
    %s238 = sphi 0, %s224
    %s242 = sphi 0, %s242
    %s244 = sphi 0, %s242
    %s245 = sphi 0, %s244
    %s259 = sphi 0, %s245
    %s265 = sphi 0, %s267
    %s268 = sphi 0, %s265
    %s269 = sphi 0, %s268
    %s285 = sphi 0, %s269
    %s291 = sphi 0, %s293
    %s294 = sphi 0, %s291
    %s295 = sphi 0, %s294
    %s311 = sphi 0, %s295
  $region4: #{enetv2_forward.2} parent=0 // loop_header_branch
    %22 = sbr.rel (%p20) target = $region8
  $region5: #{enetv2_forward.2} parent=0 // loop_body
    %s24 = ssub.s32 %s19, 1
    %s25 = ssub.s32 %s19, 2
    %s26 = sadd.s32 %s19, 1
    %s27 = ssub.s32 %s19, %s26
    %p28 = scmp.eq.s32.totalorder %s27, 0
    %s30 = sadd.s32 %s29, 1
    %s31 = scalar_select %p28, %s29, %s30
    %p34 = pneg %p28
    %p35 = scmp.eq.s32.totalorder %s19, 1
    %p36 = por %p34, %p35
    %p37 = scmp.ne.s32.totalorder %s29, %s32
    %p38 = scmp.eq.s32.totalorder %s19, 0
    %p39 = por %p37, %p38
    %p40 = scmp.ne.s32.totalorder %s29, %s32
    %p41 = scmp.eq.s32.totalorder %s24, 1
    %p42 = por %p40, %p41
    %p43 = scmp.ne.s32.totalorder %s32, %s33
    %p44 = scmp.eq.s32.totalorder %s24, 0
    %p45 = por %p43, %p44
    %p46 = scmp.ne.s32.totalorder %s32, %s33
    %p47 = scmp.eq.s32.totalorder %s25, 1
    %p48 = por %p46, %p47
    %p50 = scmp.ne.s32.totalorder %s33, %s49
    %p51 = scmp.eq.s32.totalorder %s25, 0
    %p52 = por %p50, %p51
    %s54 = sadd.s32 %s53, 1
    %p57 = scmp.eq.s32.totalorder %s19, 1
    %p58 = scmp.ne.s32.totalorder %s53, %s55
    %p59 = scmp.eq.s32.totalorder %s19, 0
    %p60 = por %p58, %p59
    %p61 = scmp.ne.s32.totalorder %s53, %s55
    %p62 = scmp.eq.s32.totalorder %s24, 1
    %p63 = por %p61, %p62
    %p64 = scmp.ne.s32.totalorder %s55, %s56
    %p65 = scmp.eq.s32.totalorder %s24, 0
    %p66 = por %p64, %p65
    %p67 = scmp.ne.s32.totalorder %s55, %s56
    %p68 = scmp.eq.s32.totalorder %s25, 1
    %p69 = por %p67, %p68
    %p71 = scmp.ne.s32.totalorder %s56, %s70
    %p72 = scmp.eq.s32.totalorder %s25, 0
    %p73 = por %p71, %p72
    %s75 = sadd.s32 %s74, 1
    %p78 = scmp.eq.s32.totalorder %s19, 1
    %p79 = scmp.ne.s32.totalorder %s74, %s76
    %p80 = scmp.eq.s32.totalorder %s19, 0
    %p81 = por %p79, %p80
    %p82 = scmp.ne.s32.totalorder %s74, %s76
    %p83 = scmp.eq.s32.totalorder %s24, 1
    %p84 = por %p82, %p83
    %p85 = scmp.ne.s32.totalorder %s76, %s77
    %p86 = scmp.eq.s32.totalorder %s24, 0
    %p87 = por %p85, %p86
    %p88 = scmp.ne.s32.totalorder %s76, %s77
    %p89 = scmp.eq.s32.totalorder %s25, 1
    %p90 = por %p88, %p89
    %p92 = scmp.ne.s32.totalorder %s77, %s91
    %p93 = scmp.eq.s32.totalorder %s25, 0
    %p94 = por %p92, %p93
    %s96 = sadd.s32 %s95, 1
    %p99 = scmp.eq.s32.totalorder %s19, 1
    %p100 = scmp.ne.s32.totalorder %s95, %s97
    %p101 = scmp.eq.s32.totalorder %s19, 0
    %p102 = por %p100, %p101
    %p103 = scmp.ne.s32.totalorder %s95, %s97
    %p104 = scmp.eq.s32.totalorder %s24, 1
    %p105 = por %p103, %p104
    %p106 = scmp.ne.s32.totalorder %s97, %s98
    %p107 = scmp.eq.s32.totalorder %s24, 0
    %p108 = por %p106, %p107
    %p109 = scmp.ne.s32.totalorder %s97, %s98
    %p110 = scmp.eq.s32.totalorder %s25, 1
    %p111 = por %p109, %p110
    %p113 = scmp.ne.s32.totalorder %s98, %s112
    %p114 = scmp.eq.s32.totalorder %s25, 0
    %p115 = por %p113, %p114
    %s117 = sadd.s32 %s116, 1
    %p120 = scmp.eq.s32.totalorder %s19, 1
    %p121 = scmp.ne.s32.totalorder %s116, %s118
    %p122 = scmp.eq.s32.totalorder %s19, 0
    %p123 = por %p121, %p122
    %p124 = scmp.ne.s32.totalorder %s116, %s118
    %p125 = scmp.eq.s32.totalorder %s24, 1
    %p126 = por %p124, %p125
    %p127 = scmp.ne.s32.totalorder %s118, %s119
    %p128 = scmp.eq.s32.totalorder %s24, 0
    %p129 = por %p127, %p128
    %p130 = scmp.ne.s32.totalorder %s118, %s119
    %p131 = scmp.eq.s32.totalorder %s25, 1
    %p132 = por %p130, %p131
    %p134 = scmp.ne.s32.totalorder %s119, %s133
    %p135 = scmp.eq.s32.totalorder %s25, 0
    %p136 = por %p134, %p135
    %s138 = sadd.s32 %s137, 1
    %p141 = scmp.eq.s32.totalorder %s19, 1
    %p142 = scmp.ne.s32.totalorder %s137, %s139
    %p143 = scmp.eq.s32.totalorder %s19, 0
    %p144 = por %p142, %p143
    %p145 = scmp.ne.s32.totalorder %s137, %s139
    %p146 = scmp.eq.s32.totalorder %s24, 1
    %p147 = por %p145, %p146
    %p148 = scmp.ne.s32.totalorder %s139, %s140
    %p149 = scmp.eq.s32.totalorder %s24, 0
    %p150 = por %p148, %p149
    %p151 = scmp.ne.s32.totalorder %s139, %s140
    %p152 = scmp.eq.s32.totalorder %s25, 1
    %p153 = por %p151, %p152
    %p155 = scmp.ne.s32.totalorder %s140, %s154
    %p156 = scmp.eq.s32.totalorder %s25, 0
    %p157 = por %p155, %p156
    %s159 = sadd.s32 %s158, 1
    %p162 = scmp.eq.s32.totalorder %s19, 1
    %p163 = scmp.ne.s32.totalorder %s158, %s160
    %p164 = scmp.eq.s32.totalorder %s19, 0
    %p165 = por %p163, %p164
    %p166 = scmp.ne.s32.totalorder %s158, %s160
    %p167 = scmp.eq.s32.totalorder %s24, 1
    %p168 = por %p166, %p167
    %p169 = scmp.ne.s32.totalorder %s160, %s161
    %p170 = scmp.eq.s32.totalorder %s24, 0
    %p171 = por %p169, %p170
    %p172 = scmp.ne.s32.totalorder %s160, %s161
    %p173 = scmp.eq.s32.totalorder %s25, 1
    %p174 = por %p172, %p173
    %p176 = scmp.ne.s32.totalorder %s161, %s175
    %p177 = scmp.eq.s32.totalorder %s25, 0
    %p178 = por %p176, %p177
    %s180 = sadd.s32 %s179, 1
    %p183 = scmp.eq.s32.totalorder %s19, 1
    %p184 = scmp.ne.s32.totalorder %s179, %s181
    %p185 = scmp.eq.s32.totalorder %s19, 0
    %p186 = por %p184, %p185
    %p187 = scmp.ne.s32.totalorder %s179, %s181
    %p188 = scmp.eq.s32.totalorder %s24, 1
    %p189 = por %p187, %p188
    %p190 = scmp.ne.s32.totalorder %s181, %s182
    %p191 = scmp.eq.s32.totalorder %s24, 0
    %p192 = por %p190, %p191
    %p193 = scmp.ne.s32.totalorder %s181, %s182
    %p194 = scmp.eq.s32.totalorder %s25, 1
    %p195 = por %p193, %p194
    %p197 = scmp.ne.s32.totalorder %s182, %s196
    %p198 = scmp.eq.s32.totalorder %s25, 0
    %p199 = por %p197, %p198
    %s201 = sadd.s32 %s200, 1
    %p204 = scmp.eq.s32.totalorder %s19, 1
    %p205 = scmp.ne.s32.totalorder %s200, %s202
    %p206 = scmp.eq.s32.totalorder %s19, 0
    %p207 = por %p205, %p206
    %p208 = scmp.ne.s32.totalorder %s200, %s202
    %p209 = scmp.eq.s32.totalorder %s24, 1
    %p210 = por %p208, %p209
    %p211 = scmp.ne.s32.totalorder %s202, %s203
    %p212 = scmp.eq.s32.totalorder %s24, 0
    %p213 = por %p211, %p212
    %p214 = scmp.ne.s32.totalorder %s202, %s203
    %p215 = scmp.eq.s32.totalorder %s25, 1
    %p216 = por %p214, %p215
    %p218 = scmp.ne.s32.totalorder %s203, %s217
    %p219 = scmp.eq.s32.totalorder %s25, 0
    %p220 = por %p218, %p219
    %s222 = sadd.s32 %s221, 1
    %p225 = scmp.eq.s32.totalorder %s19, 1
    %p226 = scmp.ne.s32.totalorder %s221, %s223
    %p227 = scmp.eq.s32.totalorder %s19, 0
    %p228 = por %p226, %p227
    %p229 = scmp.ne.s32.totalorder %s221, %s223
    %p230 = scmp.eq.s32.totalorder %s24, 1
    %p231 = por %p229, %p230
    %p232 = scmp.ne.s32.totalorder %s223, %s224
    %p233 = scmp.eq.s32.totalorder %s24, 0
    %p234 = por %p232, %p233
    %p235 = scmp.ne.s32.totalorder %s223, %s224
    %p236 = scmp.eq.s32.totalorder %s25, 1
    %p237 = por %p235, %p236
    %p239 = scmp.ne.s32.totalorder %s224, %s238
    %p240 = scmp.eq.s32.totalorder %s25, 0
    %p241 = por %p239, %p240
    %s243 = sadd.s32 %s242, 1
    %p246 = scmp.eq.s32.totalorder %s19, 1
    %p247 = scmp.ne.s32.totalorder %s242, %s244
    %p248 = scmp.eq.s32.totalorder %s19, 0
    %p249 = por %p247, %p248
    %p250 = scmp.ne.s32.totalorder %s242, %s244
    %p251 = scmp.eq.s32.totalorder %s24, 1
    %p252 = por %p250, %p251
    %p253 = scmp.ne.s32.totalorder %s244, %s245
    %p254 = scmp.eq.s32.totalorder %s24, 0
    %p255 = por %p253, %p254
    %p256 = scmp.ne.s32.totalorder %s244, %s245
    %p257 = scmp.eq.s32.totalorder %s25, 1
    %p258 = por %p256, %p257
    %p260 = scmp.ne.s32.totalorder %s245, %s259
    %p261 = scmp.eq.s32.totalorder %s25, 0
    %p262 = por %p260, %p261
    %s263 = ssub.s32 %s19, %s26
    %p264 = scmp.eq.s32.totalorder %s263, 0
    %s266 = sadd.s32 %s265, 1
    %s267 = scalar_select %p264, %s265, %s266
    %p270 = pneg %p264
    %p271 = scmp.eq.s32.totalorder %s19, 1
    %p272 = por %p270, %p271
    %p273 = scmp.ne.s32.totalorder %s265, %s268
    %p274 = scmp.eq.s32.totalorder %s19, 0
    %p275 = por %p273, %p274
    %p276 = scmp.ne.s32.totalorder %s265, %s268
    %p277 = scmp.eq.s32.totalorder %s24, 1
    %p278 = por %p276, %p277
    %p279 = scmp.ne.s32.totalorder %s268, %s269
    %p280 = scmp.eq.s32.totalorder %s24, 0
    %p281 = por %p279, %p280
    %p282 = scmp.ne.s32.totalorder %s268, %s269
    %p283 = scmp.eq.s32.totalorder %s25, 1
    %p284 = por %p282, %p283
    %p286 = scmp.ne.s32.totalorder %s269, %s285
    %p287 = scmp.eq.s32.totalorder %s25, 0
    %p288 = por %p286, %p287
    %s289 = ssub.s32 %s19, %s26
    %p290 = scmp.eq.s32.totalorder %s289, 0
    %s292 = sadd.s32 %s291, 1
    %s293 = scalar_select %p290, %s291, %s292
    %p296 = pneg %p290
    %p297 = scmp.eq.s32.totalorder %s19, 1
    %p298 = por %p296, %p297
    %p299 = scmp.ne.s32.totalorder %s291, %s294
    %p300 = scmp.eq.s32.totalorder %s19, 0
    %p301 = por %p299, %p300
    %p302 = scmp.ne.s32.totalorder %s291, %s294
    %p303 = scmp.eq.s32.totalorder %s24, 1
    %p304 = por %p302, %p303
    %p305 = scmp.ne.s32.totalorder %s294, %s295
    %p306 = scmp.eq.s32.totalorder %s24, 0
    %p307 = por %p305, %p306
    %p308 = scmp.ne.s32.totalorder %s294, %s295
    %p309 = scmp.eq.s32.totalorder %s25, 1
    %p310 = por %p308, %p309
    %p312 = scmp.ne.s32.totalorder %s295, %s311
    %p313 = scmp.eq.s32.totalorder %s25, 0
    %p314 = por %p312, %p313
    %p315 = scmp.le.s32.totalorder 1, %s19
    %p316 = scmp.lt.s32.totalorder %s19, 3
    %p317 = pnand %p315, %p316
    %p318 = pneg %p317
    // Predicated region
    $region9: #{enetv2_forward.2} parent=5 // pred_check
      _
    $region10: #{enetv2_forward.2} parent=5 // pred_check_branch
      %320 = sbr.rel (%p317) target = $region12
    $region11: #{enetv2_forward.2} parent=5 // pred_region
      %s321 = ssub.s32 %s19, 1
      // Predicated region
      $region13: #{enetv2_forward.2} parent=11 // pred_check
        %p322 = pneg %p66
      $region14: #{enetv2_forward.2} parent=11 // pred_check_branch
        %324 = sbr.rel (%p322) target = $region16
      $region15: #{enetv2_forward.2} parent=11 // pred_region
        _
      $region16: #{enetv2_forward.2} parent=11 // pred_fallthru
        _
      // Predicated region
      $region17: #{enetv2_forward.2} parent=11 // pred_check
        %p325 = pneg %p87
      $region18: #{enetv2_forward.2} parent=11 // pred_check_branch
        %327 = sbr.rel (%p325) target = $region20
      $region19: #{enetv2_forward.2} parent=11 // pred_region
        _
      $region20: #{enetv2_forward.2} parent=11 // pred_fallthru
        _
      // Predicated region
      $region21: #{enetv2_forward.2} parent=11 // pred_check
        %p328 = pneg %p108
      $region22: #{enetv2_forward.2} parent=11 // pred_check_branch
        %330 = sbr.rel (%p328) target = $region24
      $region23: #{enetv2_forward.2} parent=11 // pred_region
        _
      $region24: #{enetv2_forward.2} parent=11 // pred_fallthru
        _
      // Predicated region
      $region25: #{enetv2_forward.2} parent=11 // pred_check
        %p331 = pneg %p129
      $region26: #{enetv2_forward.2} parent=11 // pred_check_branch
        %333 = sbr.rel (%p331) target = $region28
      $region27: #{enetv2_forward.2} parent=11 // pred_region
        _
      $region28: #{enetv2_forward.2} parent=11 // pred_fallthru
        _
      // Predicated region
      $region29: #{enetv2_forward.2} parent=11 // pred_check
        %p334 = pneg %p150
      $region30: #{enetv2_forward.2} parent=11 // pred_check_branch
        %336 = sbr.rel (%p334) target = $region32
      $region31: #{enetv2_forward.2} parent=11 // pred_region
        _
      $region32: #{enetv2_forward.2} parent=11 // pred_fallthru
        _
      // Predicated region
      $region33: #{enetv2_forward.2} parent=11 // pred_check
        %p337 = pneg %p171
      $region34: #{enetv2_forward.2} parent=11 // pred_check_branch
        %339 = sbr.rel (%p337) target = $region36
      $region35: #{enetv2_forward.2} parent=11 // pred_region
        _
      $region36: #{enetv2_forward.2} parent=11 // pred_fallthru
        _
      // Predicated region
      $region37: #{enetv2_forward.2} parent=11 // pred_check
        %p340 = pneg %p192
      $region38: #{enetv2_forward.2} parent=11 // pred_check_branch
        %342 = sbr.rel (%p340) target = $region40
      $region39: #{enetv2_forward.2} parent=11 // pred_region
        _
      $region40: #{enetv2_forward.2} parent=11 // pred_fallthru
        _
      // Predicated region
      $region41: #{enetv2_forward.2} parent=11 // pred_check
        %p343 = pneg %p213
      $region42: #{enetv2_forward.2} parent=11 // pred_check_branch
        %345 = sbr.rel (%p343) target = $region44
      $region43: #{enetv2_forward.2} parent=11 // pred_region
        _
      $region44: #{enetv2_forward.2} parent=11 // pred_fallthru
        _
      // Predicated region
      $region45: #{enetv2_forward.2} parent=11 // pred_check
        %p346 = pneg %p234
      $region46: #{enetv2_forward.2} parent=11 // pred_check_branch
        %348 = sbr.rel (%p346) target = $region48
      $region47: #{enetv2_forward.2} parent=11 // pred_region
        _
      $region48: #{enetv2_forward.2} parent=11 // pred_fallthru
        _
      // Predicated region
      $region49: #{enetv2_forward.2} parent=11 // pred_check
        %p349 = pneg %p255
      $region50: #{enetv2_forward.2} parent=11 // pred_check_branch
        %351 = sbr.rel (%p349) target = $region52
      $region51: #{enetv2_forward.2} parent=11 // pred_region
        _
      $region52: #{enetv2_forward.2} parent=11 // pred_fallthru
        _
    $region12: #{enetv2_forward.2} parent=5 // pred_fallthru
      _
    %p352 = scmp.lt.s32.totalorder %s19, 2
    // Predicated region
    $region53: #{enetv2_forward.2} parent=5 // pred_check
      %p353 = pneg %p352
    $region54: #{enetv2_forward.2} parent=5 // pred_check_branch
      %355 = sbr.rel (%p353) target = $region56
    $region55: #{enetv2_forward.2} parent=5 // pred_region
      // Predicated region
      $region57: #{enetv2_forward.2} parent=55 // pred_check
        %p356 = pneg %p39
      $region58: #{enetv2_forward.2} parent=55 // pred_check_branch
        %358 = sbr.rel (%p356) target = $region60
      $region59: #{enetv2_forward.2} parent=55 // pred_region
        %p359 = scmp.lt.s32.totalorder %s19, 1
        %s360 = scalar_select %p359, %s19, 1
        %s361 = smul.addr %s360, 8
        %s362 = smul.addr %s361, 4
        %s363 = scalar_lea.vmem %s0, %s362
      $region60: #{enetv2_forward.2} parent=55 // pred_fallthru
        _
    $region56: #{enetv2_forward.2} parent=5 // pred_fallthru
      _
    %p364 = scmp.le.s32.totalorder 1, %s19
    %p365 = scmp.lt.s32.totalorder %s19, 3
    %p366 = pnand %p364, %p365
    %p367 = pneg %p366
    // Predicated region
    $region61: #{enetv2_forward.2} parent=5 // pred_check
      _
    $region62: #{enetv2_forward.2} parent=5 // pred_check_branch
      %369 = sbr.rel (%p366) target = $region64
    $region63: #{enetv2_forward.2} parent=5 // pred_region
      %s370 = ssub.s32 %s19, 1
      %p371 = scmp.lt.s32.totalorder %s24, 1
      %s372 = scalar_select %p371, %s24, 1
      %s373 = smul.addr %s372, 8
      %s374 = smul.addr %s373, 4
      %s375 = scalar_lea.vmem %s0, %s374
      %p376 = pneg %p45
      %p377 = pneg %p42
      %p378 = pneg %p66
      %p379 = pneg %p63
      %p380 = pneg %p87
      %p381 = pneg %p84
      %p382 = pneg %p108
      %p383 = pneg %p105
      %p384 = pneg %p129
      %p385 = pneg %p126
      %p386 = pneg %p150
      %p387 = pneg %p147
      %p388 = pneg %p171
      %p389 = pneg %p168
      %p390 = pneg %p192
      %p391 = pneg %p189
      %p392 = pneg %p213
      %p393 = pneg %p210
      %p394 = pneg %p234
      %p395 = pneg %p231
      %p396 = pneg %p255
      %p397 = pneg %p252
      %p398 = pneg %p281
      %p399 = pneg %p278
      %p400 = scmp.lt.s32.totalorder %s24, 1
      %s401 = scalar_select %p400, %s24, 1
      %s402 = smul.addr %s401, 8
      %s403 = smul.addr %s402, 4
      %s404 = scalar_lea.vmem %s11, %s403
      %p405 = pneg %p307
      %p406 = pneg %p304
      %p407 = scmp.lt.s32.totalorder %s24, 1
      %s408 = scalar_select %p407, %s24, 1
      %s409 = scalar_lea.vmem %s12, %s408
      %p410 = scmp.lt.s32.totalorder %s24, 1
      %s411 = scalar_select %p410, %s24, 1
      %s412 = smul.addr %s411, 8
      %s413 = smul.addr %s412, 4
      %s414 = scalar_lea.vmem %s0, %s413
      %p415 = scmp.lt.s32.totalorder %s24, 1
      %s416 = scalar_select %p415, %s24, 1
      %s417 = smul.addr %s416, 8
      %s418 = smul.addr %s417, 4
      %s419 = scalar_lea.vmem %s11, %s418
      %p420 = scmp.lt.s32.totalorder %s24, 1
      %s421 = scalar_select %p420, %s24, 1
      %s422 = scalar_lea.vmem %s12, %s421
      %v424 = vld [vmem:[%s414] sm:$0xf]
      %v425 = vld [vmem:[%s414 + $0x4] sm:$0xf]
      %v426 = vld [vmem:[%s414 + $0x8] sm:$0xf]
      %v427 = vld [vmem:[%s414 + $0xc] sm:$0xf]
      %v428 = vld [vmem:[%s414 + $0x10] sm:$0xf]
      %v429 = vld [vmem:[%s414 + $0x14] sm:$0xf]
      %v430 = vld [vmem:[%s414 + $0x18] sm:$0xf]
      %v431 = vld [vmem:[%s414 + $0x1c] sm:$0xf]
      %v432 = vld [vmem:[%s1] sm:$0xf]
      %v433 = vld [vmem:[%s1 + $0x4] sm:$0xf]
      %v434 = vld [vmem:[%s1 + $0x8] sm:$0xf]
      %v435 = vld [vmem:[%s1 + $0xc] sm:$0x3]
      %v436 = vld [vmem:[%s2] sm:$0x1]
      %v438 = vlaneseq
      %v439 = vshrl.u32 %v438, 7
      %v440 = vsub.s32 0, %v439
      %v441 = vrot.slane %v436, %v440
      %v451 = vunpack.c.l.b16 %v424
      %v452 = vunpack.c.l.b16 %v425
      %v453 = vunpack.c.l.b16 %v426
      %v454 = vunpack.c.l.b16 %v427
      %v455 = vunpack.c.l.b16 %v428
      %v456 = vunpack.c.l.b16 %v429
      %v457 = vunpack.c.l.b16 %v430
      %v458 = vunpack.c.l.b16 %v431
      %v459 = vpack.c.b16 %v452, %v451
      %v460 = vpack.c.b16 %v454, %v453
      %v461 = vpack.c.b16 %v456, %v455
      %v462 = vpack.c.b16 %v458, %v457
      %v467 = vunpack.c.l.b16 %v432
      %v468 = vunpack.c.l.b16 %v433
      %v469 = vunpack.c.l.b16 %v434
      %v470 = vunpack.c.l.b16 %v435
      %v471 = vpack.c.b16 %v468, %v467
      %v472 = vpack.c.b16 %v470, %v469
      %vm474 = vcmask 220160
      %v476 = vsel %vm474, %v459, 0
      %v479 = vsel %vm474, %v460, 0
      %v482 = vsel %vm474, %v461, 0
      %v485 = vsel %vm474, %v462, 0
      %vm487 = vcmask 1044480
      %vm488 = vcmask 1045504
      %v489 = vsel %vm487, 4294967295, 65535
      %v490 = vsel %vm488, %v489, 0
      %v492 = vand.u32 %v472, %v490
      %494 = vmatprep.subr.bf16.mxu0 0
      %495 = vmatpush1.bf16.msra.mxu0 %v471
      %496 = vmatprep.subr.bf16.mxu0 0
      %497 = vmatpush1.bf16.msra.mxu0 %v492
      %498 = vmatprep.subr.bf16.mxu0 0
      %499 = vmatpush1.bf16.msra.mxu0 0
      %500 = vmatprep.subr.bf16.mxu0 0
      %501 = vmatpush1.bf16.msra.mxu0 0
      %502 = vmatprep.subr.bf16.mxu0 0
      %503 = vmatpush1.bf16.msra.mxu0 0
      %504 = vmatprep.subr.bf16.mxu0 0
      %505 = vmatpush1.bf16.msra.mxu0 0
      %506 = vmatprep.subr.bf16.mxu0 0
      %507 = vmatpush1.bf16.msra.mxu0 0
      %508 = vmatprep.subr.bf16.mxu0 0
      %509 = vmatpush1.bf16.msra.mxu0 0
      %510 = vmatprep.subr.bf16.mxu0 0
      %511 = vmatpush1.bf16.msra.mxu0 0
      %512 = vmatprep.subr.bf16.mxu0 0
      %513 = vmatpush1.bf16.msra.mxu0 0
      %514 = vmatprep.subr.bf16.mxu0 0
      %515 = vmatpush1.bf16.msra.mxu0 0
      %516 = vmatprep.subr.bf16.mxu0 0
      %517 = vmatpush1.bf16.msra.mxu0 0
      %518 = vmatprep.subr.bf16.mxu0 0
      %519 = vmatpush1.bf16.msra.mxu0 0
      %520 = vmatprep.subr.bf16.mxu0 0
      %521 = vmatpush1.bf16.msra.mxu0 0
      %522 = vmatprep.subr.bf16.mxu0 0
      %523 = vmatpush1.bf16.msra.mxu0 0
      %524 = vmatprep.subr.bf16.mxu0 0
      %525 = vmatpush1.bf16.msra.mxu0 0
      %526 = vmatprep.mubr.bf16.mxu0 0
      %527 = vmatmul.mubr.bf16.gmra.mrb[0].mxu0 %v476
      %v528 = vpop.f32.mrb[0].mxu0
      %v529 = vadd.f32 %v441, %v528
      %v530 = vpop.f32.mrb[0].mxu0
      %v531 = vpop.f32.mrb[0].mxu0
      %v532 = vadd.f32 %v441, %v531
      %v533 = vpop.f32.mrb[0].mxu0
      %534 = vmatprep.mubr.bf16.mxu0 0
      %535 = vmatmul.mubr.bf16.gmra.mrb[0].mxu0 %v479
      %v536 = vpop.f32.mrb[0].mxu0
      %v537 = vadd.f32 %v441, %v536
      %v538 = vpop.f32.mrb[0].mxu0
      %v539 = vpop.f32.mrb[0].mxu0
      %v540 = vadd.f32 %v441, %v539
      %v541 = vpop.f32.mrb[0].mxu0
      %542 = vmatprep.mubr.bf16.mxu0 0
      %543 = vmatmul.mubr.bf16.gmra.mrb[0].mxu0 %v482
      %v544 = vpop.f32.mrb[0].mxu0
      %v545 = vadd.f32 %v441, %v544
      %v546 = vpop.f32.mrb[0].mxu0
      %v547 = vpop.f32.mrb[0].mxu0
      %v548 = vadd.f32 %v441, %v547
      %v549 = vpop.f32.mrb[0].mxu0
      %550 = vmatprep.mubr.bf16.mxu0 0
      %551 = vmatmul.mubr.bf16.gmra.mrb[0].mxu0 %v485
      %v552 = vpop.f32.mrb[0].mxu0
      %v553 = vadd.f32 %v441, %v552
      %v554 = vpop.f32.mrb[0].mxu0
      %v555 = vpop.f32.mrb[0].mxu0
      %v556 = vadd.f32 %v441, %v555
      %v557 = vpop.f32.mrb[0].mxu0
      %558 = vdwg.mxu0
      %v559 = vxor.u32 %v529, 2147483648
      %v560 = vxor.u32 %v532, 2147483648
      %v561 = vxor.u32 %v537, 2147483648
      %v562 = vxor.u32 %v540, 2147483648
      %v563 = vxor.u32 %v545, 2147483648
      %v564 = vxor.u32 %v548, 2147483648
      %v565 = vxor.u32 %v553, 2147483648
      %v566 = vxor.u32 %v556, 2147483648
      %v567 = vmul.f32 %v559, 1.442695
      %v568 = vpow.pop %v567
      %v569 = vmul.f32 %v560, 1.442695
      %v570 = vpow.pop %v569
      %v571 = vmul.f32 %v561, 1.442695
      %v572 = vpow.pop %v571
      %v573 = vmul.f32 %v562, 1.442695
      %v574 = vpow.pop %v573
      %v575 = vmul.f32 %v563, 1.442695
      %v576 = vpow.pop %v575
      %v577 = vmul.f32 %v564, 1.442695
      %v578 = vpow.pop %v577
      %v579 = vmul.f32 %v565, 1.442695
      %v580 = vpow.pop %v579
      %v581 = vmul.f32 %v566, 1.442695
      %v582 = vpow.pop %v581
      %v583 = vadd.f32 %v568, 1.0
      %v584 = vadd.f32 %v570, 1.0
      %v585 = vadd.f32 %v572, 1.0
      %v586 = vadd.f32 %v574, 1.0
      %v587 = vadd.f32 %v576, 1.0
      %v588 = vadd.f32 %v578, 1.0
      %v589 = vadd.f32 %v580, 1.0
      %v590 = vadd.f32 %v582, 1.0
      %v591 = vrcp.pop %v583
      %v592 = vmul.f32 1.0, %v591
      %v593 = vrcp.pop %v584
      %v594 = vmul.f32 1.0, %v593
      %v595 = vrcp.pop %v585
      %v596 = vmul.f32 1.0, %v595
      %v597 = vrcp.pop %v586
      %v598 = vmul.f32 1.0, %v597
      %v599 = vrcp.pop %v587
      %v600 = vmul.f32 1.0, %v599
      %v601 = vrcp.pop %v588
      %v602 = vmul.f32 1.0, %v601
      %v603 = vrcp.pop %v589
      %v604 = vmul.f32 1.0, %v603
      %v605 = vrcp.pop %v590
      %v606 = vmul.f32 1.0, %v605
      %v607 = vmul.f32 %v529, %v592
      %v608 = vmul.f32 %v532, %v594
      %v609 = vmul.f32 %v537, %v596
      %v610 = vmul.f32 %v540, %v598
      %v611 = vmul.f32 %v545, %v600
      %v612 = vmul.f32 %v548, %v602
      %v613 = vmul.f32 %v553, %v604
      %v614 = vmul.f32 %v556, %v606
      %v615 = vpack.c.bf16 %v608, %v607
      %v616 = vpack.c.bf16 %v610, %v609
      %v617 = vpack.c.bf16 %v612, %v611
      %v618 = vpack.c.bf16 %v614, %v613
      %v619 = vld [vmem:[%s3] sm:$0xf]
      %v620 = vld [vmem:[%s3 + $0x4] sm:$0xf]
      %v621 = vld [vmem:[%s3 + $0x8] sm:$0xf]
      %v622 = vld [vmem:[%s3 + $0xc] sm:$0xf]
      %v623 = vld [vmem:[%s3 + $0x10] sm:$0xf]
      %v624 = vld [vmem:[%s3 + $0x14] sm:$0xf]
      %v625 = vld [vmem:[%s3 + $0x18] sm:$0xf]
      %v626 = vld [vmem:[%s3 + $0x1c] sm:$0xf]
      %v627 = vld [vmem:[%s3 + $0x20] sm:$0xf]
      %v628 = vld [vmem:[%s3 + $0x24] sm:$0xf]
      %v629 = vld [vmem:[%s3 + $0x28] sm:$0xf]
      %v630 = vld [vmem:[%s3 + $0x2c] sm:$0xf]
      %v631 = vld [vmem:[%s3 + $0x30] sm:$0xf]
      %v632 = vld [vmem:[%s3 + $0x34] sm:$0xf]
      %v633 = vld [vmem:[%s3 + $0x38] sm:$0xf]
      %v634 = vld [vmem:[%s3 + $0x3c] sm:$0xf]
      %v635 = vld [vmem:[%s4] sm:$0x1]
      %v637 = vlaneseq
      %v638 = vshrl.u32 %v637, 7
      %v639 = vsub.s32 0, %v638
      %v640 = vrot.slane %v635, %v639
      %v658 = vunpack.c.l.b16 %v619
      %v659 = vunpack.c.l.b16 %v620
      %v660 = vunpack.c.l.b16 %v621
      %v661 = vunpack.c.l.b16 %v622
      %v662 = vunpack.c.l.b16 %v623
      %v663 = vunpack.c.l.b16 %v624
      %v664 = vunpack.c.l.b16 %v625
      %v665 = vunpack.c.l.b16 %v626
      %v666 = vunpack.c.l.b16 %v627
      %v667 = vunpack.c.l.b16 %v628
      %v668 = vunpack.c.l.b16 %v629
      %v669 = vunpack.c.l.b16 %v630
      %v670 = vunpack.c.l.b16 %v631
      %v671 = vunpack.c.l.b16 %v632
      %v672 = vunpack.c.l.b16 %v633
      %v673 = vunpack.c.l.b16 %v634
      %v674 = vpack.c.b16 %v659, %v658
      %v675 = vpack.c.b16 %v661, %v660
      %v676 = vpack.c.b16 %v663, %v662
      %v677 = vpack.c.b16 %v665, %v664
      %v678 = vpack.c.b16 %v667, %v666
      %v679 = vpack.c.b16 %v669, %v668
      %v680 = vpack.c.b16 %v671, %v670
      %v681 = vpack.c.b16 %v673, %v672
      %690 = vmatprep.subr.bf16.mxu0 0
      %691 = vmatpush1.bf16.msra.mxu0 %v674
      %692 = vmatprep.subr.bf16.mxu0 0
      %693 = vmatpush1.bf16.msra.mxu0 %v675
      %694 = vmatprep.subr.bf16.mxu0 0
      %695 = vmatpush1.bf16.msra.mxu0 %v676
      %696 = vmatprep.subr.bf16.mxu0 0
      %697 = vmatpush1.bf16.msra.mxu0 %v677
      %698 = vmatprep.subr.bf16.mxu0 0
      %699 = vmatpush1.bf16.msra.mxu0 %v678
      %700 = vmatprep.subr.bf16.mxu0 0
      %701 = vmatpush1.bf16.msra.mxu0 %v679
      %702 = vmatprep.subr.bf16.mxu0 0
      %703 = vmatpush1.bf16.msra.mxu0 %v680
      %704 = vmatprep.subr.bf16.mxu0 0
      %705 = vmatpush1.bf16.msra.mxu0 %v681
      %706 = vmatprep.subr.bf16.mxu0 0
      %707 = vmatpush1.bf16.msra.mxu0 0
      %708 = vmatprep.subr.bf16.mxu0 0
      %709 = vmatpush1.bf16.msra.mxu0 0
      %710 = vmatprep.subr.bf16.mxu0 0
      %711 = vmatpush1.bf16.msra.mxu0 0
      %712 = vmatprep.subr.bf16.mxu0 0
      %713 = vmatpush1.bf16.msra.mxu0 0
      %714 = vmatprep.subr.bf16.mxu0 0
      %715 = vmatpush1.bf16.msra.mxu0 0
      %716 = vmatprep.subr.bf16.mxu0 0
      %717 = vmatpush1.bf16.msra.mxu0 0
      %718 = vmatprep.subr.bf16.mxu0 0
      %719 = vmatpush1.bf16.msra.mxu0 0
      %720 = vmatprep.subr.bf16.mxu0 0
      %721 = vmatpush1.bf16.msra.mxu0 0
      %722 = vmatprep.mubr.bf16.mxu0 0
      %723 = vmatmul.mubr.bf16.gmra.mrb[0].mxu0 %v615
      %v724 = vpop.f32.mrb[0].mxu0
      %v725 = vadd.f32 %v640, %v724
      %v726 = vpop.f32.mrb[0].mxu0
      %v727 = vpop.f32.mrb[0].mxu0
      %v728 = vadd.f32 %v640, %v727
      %v729 = vpop.f32.mrb[0].mxu0
      %730 = vmatprep.mubr.bf16.mxu0 0
      %731 = vmatmul.mubr.bf16.gmra.mrb[0].mxu0 %v616
      %v732 = vpop.f32.mrb[0].mxu0
      %v733 = vadd.f32 %v640, %v732
      %v734 = vpop.f32.mrb[0].mxu0
      %v735 = vpop.f32.mrb[0].mxu0
      %v736 = vadd.f32 %v640, %v735
      %v737 = vpop.f32.mrb[0].mxu0
      %738 = vmatprep.mubr.bf16.mxu0 0
      %739 = vmatmul.mubr.bf16.gmra.mrb[0].mxu0 %v617
      %v740 = vpop.f32.mrb[0].mxu0
      %v741 = vadd.f32 %v640, %v740
      %v742 = vpop.f32.mrb[0].mxu0
      %v743 = vpop.f32.mrb[0].mxu0
      %v744 = vadd.f32 %v640, %v743
      %v745 = vpop.f32.mrb[0].mxu0
      %746 = vmatprep.mubr.bf16.mxu0 0
      %747 = vmatmul.mubr.bf16.gmra.mrb[0].mxu0 %v618
      %v748 = vpop.f32.mrb[0].mxu0
      %v749 = vadd.f32 %v640, %v748
      %v750 = vpop.f32.mrb[0].mxu0
      %v751 = vpop.f32.mrb[0].mxu0
      %v752 = vadd.f32 %v640, %v751
      %v753 = vpop.f32.mrb[0].mxu0
      %754 = vdwg.mxu0
      %v755 = vxor.u32 %v725, 2147483648
      %v756 = vxor.u32 %v728, 2147483648
      %v757 = vxor.u32 %v733, 2147483648
      %v758 = vxor.u32 %v736, 2147483648
      %v759 = vxor.u32 %v741, 2147483648
      %v760 = vxor.u32 %v744, 2147483648
      %v761 = vxor.u32 %v749, 2147483648
      %v762 = vxor.u32 %v752, 2147483648
      %v763 = vmul.f32 %v755, 1.442695
      %v764 = vpow.pop %v763
      %v765 = vmul.f32 %v756, 1.442695
      %v766 = vpow.pop %v765
      %v767 = vmul.f32 %v757, 1.442695
      %v768 = vpow.pop %v767
      %v769 = vmul.f32 %v758, 1.442695
      %v770 = vpow.pop %v769
      %v771 = vmul.f32 %v759, 1.442695
      %v772 = vpow.pop %v771
      %v773 = vmul.f32 %v760, 1.442695
      %v774 = vpow.pop %v773
      %v775 = vmul.f32 %v761, 1.442695
      %v776 = vpow.pop %v775
      %v777 = vmul.f32 %v762, 1.442695
      %v778 = vpow.pop %v777
      %v779 = vadd.f32 %v764, 1.0
      %v780 = vadd.f32 %v766, 1.0
      %v781 = vadd.f32 %v768, 1.0
      %v782 = vadd.f32 %v770, 1.0
      %v783 = vadd.f32 %v772, 1.0
      %v784 = vadd.f32 %v774, 1.0
      %v785 = vadd.f32 %v776, 1.0
      %v786 = vadd.f32 %v778, 1.0
      %v787 = vrcp.pop %v779
      %v788 = vmul.f32 1.0, %v787
      %v789 = vrcp.pop %v780
      %v790 = vmul.f32 1.0, %v789
      %v791 = vrcp.pop %v781
      %v792 = vmul.f32 1.0, %v791
      %v793 = vrcp.pop %v782
      %v794 = vmul.f32 1.0, %v793
      %v795 = vrcp.pop %v783
      %v796 = vmul.f32 1.0, %v795
      %v797 = vrcp.pop %v784
      %v798 = vmul.f32 1.0, %v797
      %v799 = vrcp.pop %v785
      %v800 = vmul.f32 1.0, %v799
      %v801 = vrcp.pop %v786
      %v802 = vmul.f32 1.0, %v801
      %v803 = vmul.f32 %v725, %v788
      %v804 = vmul.f32 %v728, %v790
      %v805 = vmul.f32 %v733, %v792
      %v806 = vmul.f32 %v736, %v794
      %v807 = vmul.f32 %v741, %v796
      %v808 = vmul.f32 %v744, %v798
      %v809 = vmul.f32 %v749, %v800
      %v810 = vmul.f32 %v752, %v802
      %v811 = vld [vmem:[%s5] sm:$0xff]
      %v812 = vld [vmem:[%s5 + $0x8] sm:$0x1]
      %v821 = vrot.slane %v803, 7
      %v822 = vrot.slane %v804, 7
      %v823 = vrot.slane %v805, 7
      %v824 = vrot.slane %v806, 7
      %v825 = vrot.slane %v807, 7
      %v826 = vrot.slane %v808, 7
      %v827 = vrot.slane %v809, 7
      %v828 = vrot.slane %v810, 7
      %vm837 = vcmask 1040384
      %v838 = vsel %vm837, 0.0, %v821
      %v839 = vsel %vm837, 0.0, %v822
      %v840 = vsel %vm837, 0.0, %v823
      %v841 = vsel %vm837, 0.0, %v824
      %v842 = vsel %vm837, 0.0, %v825
      %v843 = vsel %vm837, 0.0, %v826
      %v844 = vsel %vm837, 0.0, %v827
      %v845 = vsel %vm837, 0.0, %v828
      %v846 = vrot.slane %v803, 1
      %v847 = vrot.slane %v804, 1
      %v848 = vrot.slane %v805, 1
      %v849 = vrot.slane %v806, 1
      %v850 = vrot.slane %v807, 1
      %v851 = vrot.slane %v808, 1
      %v852 = vrot.slane %v809, 1
      %v853 = vrot.slane %v810, 1
      %vm862 = vcmask 1046528
      %v863 = vsel %vm862, %v846, 0.0
      %v864 = vsel %vm862, %v847, 0.0
      %v865 = vsel %vm862, %v848, 0.0
      %v866 = vsel %vm862, %v849, 0.0
      %v867 = vsel %vm862, %v850, 0.0
      %v868 = vsel %vm862, %v851, 0.0
      %v869 = vsel %vm862, %v852, 0.0
      %v870 = vsel %vm862, %v853, 0.0
      %v871 = vlaneseq
      %v872 = vshrl.u32 %v871, 7
      %v873 = vsub.s32 0, %v872
      %v874 = vrot.slane %v811, %v873
      %v875 = vmul.f32 %v874, %v838
      %v876 = vmul.f32 %v874, %v839
      %v877 = vmul.f32 %v874, %v840
      %v878 = vmul.f32 %v874, %v841
      %v879 = vmul.f32 %v874, %v842
      %v880 = vmul.f32 %v874, %v843
      %v881 = vmul.f32 %v874, %v844
      %v882 = vlaneseq
      %v883 = vshrl.u32 %v882, 7
      %v884 = vsub.s32 1, %v883
      %v885 = vrot.slane %v811, %v884
      %v886 = vmul.f32 %v885, %v803
      %v887 = vmul.f32 %v885, %v804
      %v888 = vmul.f32 %v885, %v805
      %v889 = vmul.f32 %v885, %v806
      %v890 = vmul.f32 %v885, %v807
      %v891 = vmul.f32 %v885, %v808
      %v892 = vmul.f32 %v885, %v809
      %v893 = vadd.f32 %v875, %v886
      %v894 = vadd.f32 %v876, %v887
      %v895 = vadd.f32 %v877, %v888
      %v896 = vadd.f32 %v878, %v889
      %v897 = vadd.f32 %v879, %v890
      %v898 = vadd.f32 %v880, %v891
      %v899 = vadd.f32 %v881, %v892
      %v900 = vlaneseq
      %v901 = vshrl.u32 %v900, 7
      %v902 = vsub.s32 2, %v901
      %v903 = vrot.slane %v811, %v902
      %v904 = vmul.f32 %v903, %v863
      %v905 = vmul.f32 %v903, %v864
      %v906 = vmul.f32 %v903, %v865
      %v907 = vmul.f32 %v903, %v866
      %v908 = vmul.f32 %v903, %v867
      %v909 = vmul.f32 %v903, %v868
      %v910 = vmul.f32 %v903, %v869
      %v911 = vadd.f32 %v893, %v904
      %v912 = vadd.f32 %v894, %v905
      %v913 = vadd.f32 %v895, %v906
      %v914 = vadd.f32 %v896, %v907
      %v915 = vadd.f32 %v897, %v908
      %v916 = vadd.f32 %v898, %v909
      %v917 = vadd.f32 %v899, %v910
      %v918 = vlaneseq
      %v919 = vshrl.u32 %v918, 7
      %v920 = vsub.s32 3, %v919
      %v921 = vrot.slane %v811, %v920
      %v922 = vmul.f32 %v921, %v838
      %v923 = vmul.f32 %v921, %v839
      %v924 = vmul.f32 %v921, %v840
      %v925 = vmul.f32 %v921, %v841
      %v926 = vmul.f32 %v921, %v842
      %v927 = vmul.f32 %v921, %v843
      %v928 = vmul.f32 %v921, %v844
      %v929 = vmul.f32 %v921, %v845
      %v930 = vlaneseq
      %v931 = vshrl.u32 %v930, 7
      %v932 = vsub.s32 4, %v931
      %v933 = vrot.slane %v811, %v932
      %v934 = vmul.f32 %v933, %v803
      %v935 = vmul.f32 %v933, %v804
      %v936 = vmul.f32 %v933, %v805
      %v937 = vmul.f32 %v933, %v806
      %v938 = vmul.f32 %v933, %v807
      %v939 = vmul.f32 %v933, %v808
      %v940 = vmul.f32 %v933, %v809
      %v941 = vmul.f32 %v933, %v810
      %v942 = vadd.f32 %v922, %v934
      %v943 = vadd.f32 %v923, %v935
      %v944 = vadd.f32 %v924, %v936
      %v945 = vadd.f32 %v925, %v937
      %v946 = vadd.f32 %v926, %v938
      %v947 = vadd.f32 %v927, %v939
      %v948 = vadd.f32 %v928, %v940
      %v949 = vadd.f32 %v929, %v941
      %v950 = vlaneseq
      %v951 = vshrl.u32 %v950, 7
      %v952 = vsub.s32 5, %v951
      %v953 = vrot.slane %v811, %v952
      %v954 = vmul.f32 %v953, %v863
      %v955 = vmul.f32 %v953, %v864
      %v956 = vmul.f32 %v953, %v865
      %v957 = vmul.f32 %v953, %v866
      %v958 = vmul.f32 %v953, %v867
      %v959 = vmul.f32 %v953, %v868
      %v960 = vmul.f32 %v953, %v869
      %v961 = vmul.f32 %v953, %v870
      %v962 = vadd.f32 %v942, %v954
      %v963 = vadd.f32 %v943, %v955
      %v964 = vadd.f32 %v944, %v956
      %v965 = vadd.f32 %v945, %v957
      %v966 = vadd.f32 %v946, %v958
      %v967 = vadd.f32 %v947, %v959
      %v968 = vadd.f32 %v948, %v960
      %v969 = vadd.f32 %v949, %v961
      %v970 = vlaneseq
      %v971 = vshrl.u32 %v970, 7
      %v972 = vsub.s32 6, %v971
      %v973 = vrot.slane %v811, %v972
      %v974 = vmul.f32 %v973, %v839
      %v975 = vmul.f32 %v973, %v840
      %v976 = vmul.f32 %v973, %v841
      %v977 = vmul.f32 %v973, %v842
      %v978 = vmul.f32 %v973, %v843
      %v979 = vmul.f32 %v973, %v844
      %v980 = vmul.f32 %v973, %v845
      %v981 = vlaneseq
      %v982 = vshrl.u32 %v981, 7
      %v983 = vsub.s32 7, %v982
      %v984 = vrot.slane %v811, %v983
      %v985 = vmul.f32 %v984, %v804
      %v986 = vmul.f32 %v984, %v805
      %v987 = vmul.f32 %v984, %v806
      %v988 = vmul.f32 %v984, %v807
      %v989 = vmul.f32 %v984, %v808
      %v990 = vmul.f32 %v984, %v809
      %v991 = vmul.f32 %v984, %v810
      %v992 = vadd.f32 %v974, %v985
      %v993 = vadd.f32 %v975, %v986
      %v994 = vadd.f32 %v976, %v987
      %v995 = vadd.f32 %v977, %v988
      %v996 = vadd.f32 %v978, %v989
      %v997 = vadd.f32 %v979, %v990
      %v998 = vadd.f32 %v980, %v991
      %v999 = vlaneseq
      %v1000 = vshrl.u32 %v999, 7
      %v1001 = vsub.s32 0, %v1000
      %v1002 = vrot.slane %v812, %v1001
      %v1003 = vmul.f32 %v1002, %v864
      %v1004 = vmul.f32 %v1002, %v865
      %v1005 = vmul.f32 %v1002, %v866
      %v1006 = vmul.f32 %v1002, %v867
      %v1007 = vmul.f32 %v1002, %v868
      %v1008 = vmul.f32 %v1002, %v869
      %v1009 = vmul.f32 %v1002, %v870
      %v1010 = vadd.f32 %v992, %v1003
      %v1011 = vadd.f32 %v993, %v1004
      %v1012 = vadd.f32 %v994, %v1005
      %v1013 = vadd.f32 %v995, %v1006
      %v1014 = vadd.f32 %v996, %v1007
      %v1015 = vadd.f32 %v997, %v1008
      %v1016 = vadd.f32 %v998, %v1009
      %v1017 = vadd.f32 %v962, 0.0
      %v1018 = vadd.f32 %v963, %v911
      %v1019 = vadd.f32 %v964, %v912
      %v1020 = vadd.f32 %v965, %v913
      %v1021 = vadd.f32 %v966, %v914
      %v1022 = vadd.f32 %v967, %v915
      %v1023 = vadd.f32 %v968, %v916
      %v1024 = vadd.f32 %v969, %v917
      %v1025 = vadd.f32 %v1017, %v1010
      %v1026 = vadd.f32 %v1018, %v1011
      %v1027 = vadd.f32 %v1019, %v1012
      %v1028 = vadd.f32 %v1020, %v1013
      %v1029 = vadd.f32 %v1021, %v1014
      %v1030 = vadd.f32 %v1022, %v1015
      %v1031 = vadd.f32 %v1023, %v1016
      %v1032 = vadd.f32 %v1024, 0.0
      %v1033 = vld [vmem:[%s6] sm:$0x1]
      %v1035 = vlaneseq
      %v1036 = vshrl.u32 %v1035, 7
      %v1037 = vsub.s32 0, %v1036
      %v1038 = vrot.slane %v1033, %v1037
      %v1040 = vadd.f32 %v1025, %v1038
      %v1041 = vadd.f32 %v1026, %v1038
      %v1042 = vadd.f32 %v1027, %v1038
      %v1043 = vadd.f32 %v1028, %v1038
      %v1044 = vadd.f32 %v1029, %v1038
      %v1045 = vadd.f32 %v1030, %v1038
      %v1046 = vadd.f32 %v1031, %v1038
      %v1047 = vadd.f32 %v1032, %v1038
      %v1048 = vxor.u32 %v1040, 2147483648
      %v1049 = vxor.u32 %v1041, 2147483648
      %v1050 = vxor.u32 %v1042, 2147483648
      %v1051 = vxor.u32 %v1043, 2147483648
      %v1052 = vxor.u32 %v1044, 2147483648
      %v1053 = vxor.u32 %v1045, 2147483648
      %v1054 = vxor.u32 %v1046, 2147483648
      %v1055 = vxor.u32 %v1047, 2147483648
      %v1056 = vmul.f32 %v1048, 1.442695
      %v1057 = vpow.pop %v1056
      %v1058 = vmul.f32 %v1049, 1.442695
      %v1059 = vpow.pop %v1058
      %v1060 = vmul.f32 %v1050, 1.442695
      %v1061 = vpow.pop %v1060
      %v1062 = vmul.f32 %v1051, 1.442695
      %v1063 = vpow.pop %v1062
      %v1064 = vmul.f32 %v1052, 1.442695
      %v1065 = vpow.pop %v1064
      %v1066 = vmul.f32 %v1053, 1.442695
      %v1067 = vpow.pop %v1066
      %v1068 = vmul.f32 %v1054, 1.442695
      %v1069 = vpow.pop %v1068
      %v1070 = vmul.f32 %v1055, 1.442695
      %v1071 = vpow.pop %v1070
      %v1072 = vadd.f32 %v1057, 1.0
      %v1073 = vadd.f32 %v1059, 1.0
      %v1074 = vadd.f32 %v1061, 1.0
      %v1075 = vadd.f32 %v1063, 1.0
      %v1076 = vadd.f32 %v1065, 1.0
      %v1077 = vadd.f32 %v1067, 1.0
      %v1078 = vadd.f32 %v1069, 1.0
      %v1079 = vadd.f32 %v1071, 1.0
      %v1080 = vrcp.pop %v1072
      %v1081 = vmul.f32 1.0, %v1080
      %v1082 = vrcp.pop %v1073
      %v1083 = vmul.f32 1.0, %v1082
      %v1084 = vrcp.pop %v1074
      %v1085 = vmul.f32 1.0, %v1084
      %v1086 = vrcp.pop %v1075
      %v1087 = vmul.f32 1.0, %v1086
      %v1088 = vrcp.pop %v1076
      %v1089 = vmul.f32 1.0, %v1088
      %v1090 = vrcp.pop %v1077
      %v1091 = vmul.f32 1.0, %v1090
      %v1092 = vrcp.pop %v1078
      %v1093 = vmul.f32 1.0, %v1092
      %v1094 = vrcp.pop %v1079
      %v1095 = vmul.f32 1.0, %v1094
      %v1096 = vmul.f32 %v1040, %v1081
      %v1097 = vmul.f32 %v1041, %v1083
      %v1098 = vmul.f32 %v1042, %v1085
      %v1099 = vmul.f32 %v1043, %v1087
      %v1100 = vmul.f32 %v1044, %v1089
      %v1101 = vmul.f32 %v1045, %v1091
      %v1102 = vmul.f32 %v1046, %v1093
      %v1103 = vmul.f32 %v1047, %v1095
      %v1104 = vadd.f32 %v1096, %v1097
      %v1105 = vadd.f32 %v1104, %v1098
      %v1106 = vadd.f32 %v1105, %v1099
      %v1107 = vadd.f32 %v1106, %v1100
      %v1108 = vadd.f32 %v1107, %v1101
      %v1109 = vadd.f32 %v1108, %v1102
      %v1110 = vadd.f32 %v1109, %v1103
      %v1111 = vrot.slane %v1110, 4
      %v1112 = vadd.f32 %v1110, %v1111
      %v1113 = vrot.slane %v1112, 2
      %v1114 = vadd.f32 %v1112, %v1113
      %v1115 = vrot.slane %v1114, 1
      %v1116 = vadd.f32 %v1114, %v1115
      %v1117 = vmul.f32 %v1116, 0.015625
      %v1118 = vld [vmem:[%s7] sm:$0xff]
      %v1119 = vld [vmem:[%s7 + $0x8] sm:$0xff]
      %v1120 = vld [vmem:[%s7 + $0x10] sm:$0xff]
      %v1121 = vld [vmem:[%s7 + $0x18] sm:$0xff]
      %v1122 = vld [vmem:[%s7 + $0x20] sm:$0xff]
      %v1123 = vld [vmem:[%s7 + $0x28] sm:$0xff]
      %v1124 = vld [vmem:[%s7 + $0x30] sm:$0xff]
      %v1125 = vld [vmem:[%s7 + $0x38] sm:$0xff]
      %v1126 = vld [vmem:[%s7 + $0x40] sm:$0xff]
      %v1127 = vld [vmem:[%s7 + $0x48] sm:$0xff]
      %v1128 = vld [vmem:[%s7 + $0x50] sm:$0xff]
      %v1129 = vld [vmem:[%s7 + $0x58] sm:$0xff]
      %v1130 = vld [vmem:[%s7 + $0x60] sm:$0xff]
      %v1131 = vld [vmem:[%s7 + $0x68] sm:$0xff]
      %v1132 = vld [vmem:[%s7 + $0x70] sm:$0xff]
      %v1133 = vld [vmem:[%s7 + $0x78] sm:$0xff]
      %v1134 = vld [vmem:[%s8] sm:$0x1]
      %1135 = vmatprep.subr.mxu0 0.0
      %1136 = vmatpush1.msra.mxu0 %v1118
      %1137 = vmatprep.subr.mxu0 0.0
      %1138 = vmatpush1.msra.mxu0 %v1119
      %1139 = vmatprep.subr.mxu0 0.0
      %1140 = vmatpush1.msra.mxu0 %v1120
      %1141 = vmatprep.subr.mxu0 0.0
      %1142 = vmatpush1.msra.mxu0 %v1121
      %1143 = vmatprep.subr.mxu0 0.0
      %1144 = vmatpush1.msra.mxu0 %v1122
      %1145 = vmatprep.subr.mxu0 0.0
      %1146 = vmatpush1.msra.mxu0 %v1123
      %1147 = vmatprep.subr.mxu0 0.0
      %1148 = vmatpush1.msra.mxu0 %v1124
      %1149 = vmatprep.subr.mxu0 0.0
      %1150 = vmatpush1.msra.mxu0 %v1125
      %1151 = vmatprep.subr.mxu0 0.0
      %1152 = vmatpush1.msra.mxu0 %v1126
      %1153 = vmatprep.subr.mxu0 0.0
      %1154 = vmatpush1.msra.mxu0 %v1127
      %1155 = vmatprep.subr.mxu0 0.0
      %1156 = vmatpush1.msra.mxu0 %v1128
      %1157 = vmatprep.subr.mxu0 0.0
      %1158 = vmatpush1.msra.mxu0 %v1129
      %1159 = vmatprep.subr.mxu0 0.0
      %1160 = vmatpush1.msra.mxu0 %v1130
      %1161 = vmatprep.subr.mxu0 0.0
      %1162 = vmatpush1.msra.mxu0 %v1131
      %1163 = vmatprep.subr.mxu0 0.0
      %1164 = vmatpush1.msra.mxu0 %v1132
      %1165 = vmatprep.subr.mxu0 0.0
      %1166 = vmatpush1.msra.mxu0 %v1133
      %1167 = vmatprep.subr.mxu0 0.0
      %1168 = vmatpush1.msra.mxu0 0.0
      %1169 = vmatprep.subr.mxu0 0.0
      %1170 = vmatpush1.msra.mxu0 0.0
      %1171 = vmatprep.subr.mxu0 0.0
      %1172 = vmatpush1.msra.mxu0 0.0
      %1173 = vmatprep.subr.mxu0 0.0
      %1174 = vmatpush1.msra.mxu0 0.0
      %1175 = vmatprep.subr.mxu0 0.0
      %1176 = vmatpush1.msra.mxu0 0.0
      %1177 = vmatprep.subr.mxu0 0.0
      %1178 = vmatpush1.msra.mxu0 0.0
      %1179 = vmatprep.subr.mxu0 0.0
      %1180 = vmatpush1.msra.mxu0 0.0
      %1181 = vmatprep.subr.mxu0 0.0
      %1182 = vmatpush1.msra.mxu0 0.0
      %1183 = vmatprep.subr.mxu0 0.0
      %1184 = vmatpush1.msra.mxu0 0.0
      %1185 = vmatprep.subr.mxu0 0.0
      %1186 = vmatpush1.msra.mxu0 0.0
      %1187 = vmatprep.subr.mxu0 0.0
      %1188 = vmatpush1.msra.mxu0 0.0
      %1189 = vmatprep.subr.mxu0 0.0
      %1190 = vmatpush1.msra.mxu0 0.0
      %1191 = vmatprep.subr.mxu0 0.0
      %1192 = vmatpush1.msra.mxu0 0.0
      %1193 = vmatprep.subr.mxu0 0.0
      %1194 = vmatpush1.msra.mxu0 0.0
      %1195 = vmatprep.subr.mxu0 0.0
      %1196 = vmatpush1.msra.mxu0 0.0
      %1197 = vmatprep.subr.mxu0 0.0
      %1198 = vmatpush1.msra.mxu0 0.0
      %1199 = vmatprep.mubr.f32.mxu0 0.0
      %1200 = vmatmul.mubr.f32.gmra.mrb[0].mxu0 %v1117
      %v1201 = vpop.f32.mrb[0].mxu0
      %v1202 = vadd.f32 %v1134, %v1201
      %v1203 = vpop.f32.mrb[0].mxu0
      %1204 = vdwg.mxu0
      %v1205 = vxor.u32 %v1202, 2147483648
      %v1206 = vmul.f32 %v1205, 1.442695
      %v1207 = vpow.pop %v1206
      %v1208 = vadd.f32 %v1207, 1.0
      %v1209 = vrcp.pop %v1208
      %v1210 = vmul.f32 1.0, %v1209
      %v1211 = vmul.f32 %v1202, %v1210
      %v1212 = vld [vmem:[%s9] sm:$0xff]
      %v1213 = vld [vmem:[%s9 + $0x8] sm:$0xff]
      %v1214 = vld [vmem:[%s9 + $0x10] sm:$0xff]
      %v1215 = vld [vmem:[%s9 + $0x18] sm:$0xff]
      %v1216 = vld [vmem:[%s9 + $0x20] sm:$0xff]
      %v1217 = vld [vmem:[%s9 + $0x28] sm:$0xff]
      %v1218 = vld [vmem:[%s9 + $0x30] sm:$0xff]
      %v1219 = vld [vmem:[%s9 + $0x38] sm:$0xff]
      %v1220 = vld [vmem:[%s9 + $0x40] sm:$0xff]
      %v1221 = vld [vmem:[%s9 + $0x48] sm:$0xff]
      %v1222 = vld [vmem:[%s9 + $0x50] sm:$0xff]
      %v1223 = vld [vmem:[%s9 + $0x58] sm:$0xff]
      %v1224 = vld [vmem:[%s9 + $0x60] sm:$0xff]
      %v1225 = vld [vmem:[%s9 + $0x68] sm:$0xff]
      %v1226 = vld [vmem:[%s9 + $0x70] sm:$0xff]
      %v1227 = vld [vmem:[%s9 + $0x78] sm:$0xff]
      %v1228 = vld [vmem:[%s10] sm:$0x1]
      %1229 = vmatprep.subr.mxu0 0.0
      %1230 = vmatpush1.msra.mxu0 %v1212
      %1231 = vmatprep.subr.mxu0 0.0
      %1232 = vmatpush1.msra.mxu0 %v1213
      %1233 = vmatprep.subr.mxu0 0.0
      %1234 = vmatpush1.msra.mxu0 %v1214
      %1235 = vmatprep.subr.mxu0 0.0
      %1236 = vmatpush1.msra.mxu0 %v1215
      %1237 = vmatprep.subr.mxu0 0.0
      %1238 = vmatpush1.msra.mxu0 %v1216
      %1239 = vmatprep.subr.mxu0 0.0
      %1240 = vmatpush1.msra.mxu0 %v1217
      %1241 = vmatprep.subr.mxu0 0.0
      %1242 = vmatpush1.msra.mxu0 %v1218
      %1243 = vmatprep.subr.mxu0 0.0
      %1244 = vmatpush1.msra.mxu0 %v1219
      %1245 = vmatprep.subr.mxu0 0.0
      %1246 = vmatpush1.msra.mxu0 %v1220
      %1247 = vmatprep.subr.mxu0 0.0
      %1248 = vmatpush1.msra.mxu0 %v1221
      %1249 = vmatprep.subr.mxu0 0.0
      %1250 = vmatpush1.msra.mxu0 %v1222
      %1251 = vmatprep.subr.mxu0 0.0
      %1252 = vmatpush1.msra.mxu0 %v1223
      %1253 = vmatprep.subr.mxu0 0.0
      %1254 = vmatpush1.msra.mxu0 %v1224
      %1255 = vmatprep.subr.mxu0 0.0
      %1256 = vmatpush1.msra.mxu0 %v1225
      %1257 = vmatprep.subr.mxu0 0.0
      %1258 = vmatpush1.msra.mxu0 %v1226
      %1259 = vmatprep.subr.mxu0 0.0
      %1260 = vmatpush1.msra.mxu0 %v1227
      %1261 = vmatprep.subr.mxu0 0.0
      %1262 = vmatpush1.msra.mxu0 0.0
      %1263 = vmatprep.subr.mxu0 0.0
      %1264 = vmatpush1.msra.mxu0 0.0
      %1265 = vmatprep.subr.mxu0 0.0
      %1266 = vmatpush1.msra.mxu0 0.0
      %1267 = vmatprep.subr.mxu0 0.0
      %1268 = vmatpush1.msra.mxu0 0.0
      %1269 = vmatprep.subr.mxu0 0.0
      %1270 = vmatpush1.msra.mxu0 0.0
      %1271 = vmatprep.subr.mxu0 0.0
      %1272 = vmatpush1.msra.mxu0 0.0
      %1273 = vmatprep.subr.mxu0 0.0
      %1274 = vmatpush1.msra.mxu0 0.0
      %1275 = vmatprep.subr.mxu0 0.0
      %1276 = vmatpush1.msra.mxu0 0.0
      %1277 = vmatprep.subr.mxu0 0.0
      %1278 = vmatpush1.msra.mxu0 0.0
      %1279 = vmatprep.subr.mxu0 0.0
      %1280 = vmatpush1.msra.mxu0 0.0
      %1281 = vmatprep.subr.mxu0 0.0
      %1282 = vmatpush1.msra.mxu0 0.0
      %1283 = vmatprep.subr.mxu0 0.0
      %1284 = vmatpush1.msra.mxu0 0.0
      %1285 = vmatprep.subr.mxu0 0.0
      %1286 = vmatpush1.msra.mxu0 0.0
      %1287 = vmatprep.subr.mxu0 0.0
      %1288 = vmatpush1.msra.mxu0 0.0
      %1289 = vmatprep.subr.mxu0 0.0
      %1290 = vmatpush1.msra.mxu0 0.0
      %1291 = vmatprep.subr.mxu0 0.0
      %1292 = vmatpush1.msra.mxu0 0.0
      %1293 = vmatprep.mubr.f32.mxu0 0.0
      %1294 = vmatmul.mubr.f32.gmra.mrb[0].mxu0 %v1211
      %v1295 = vpop.f32.mrb[0].mxu0
      %v1296 = vadd.f32 %v1228, %v1295
      %v1297 = vpop.f32.mrb[0].mxu0
      %1298 = vdwg.mxu0
      %v1299 = vlaneseq
      %v1300 = vand.u32 %v1299, 127
      %vm1301 = vcmp.lt.s32.totalorder %v1300, 64
      %v1302 = vxor.u32 %v1296, 2147483648
      %v1303 = vmul.f32 %v1302, 1.442695
      %v1304 = vpow.pop %v1303
      %v1305 = vadd.f32 %v1304, 1.0
      %v1306 = vrcp.pop %v1305
      %v1307 = vmul.f32 1.0, %v1306
      %v1308 = vsel %vm1301, %v1307, 1.0
      %1309 = vst [vmem:[%s422] sm:$0x1] %v1308
      %1310 = vrot.lane.b32.xlu0 %v607, 64
      %v1311 = vpop.permute.xlu0 %1310
      %1312 = vrot.lane.b32.xlu0 %v608, 64
      %v1313 = vpop.permute.xlu0 %1312
      %1314 = vrot.lane.b32.xlu0 %v609, 64
      %v1315 = vpop.permute.xlu0 %1314
      %1316 = vrot.lane.b32.xlu0 %v610, 64
      %v1317 = vpop.permute.xlu0 %1316
      %1318 = vrot.lane.b32.xlu0 %v611, 64
      %v1319 = vpop.permute.xlu0 %1318
      %1320 = vrot.lane.b32.xlu0 %v612, 64
      %v1321 = vpop.permute.xlu0 %1320
      %1322 = vrot.lane.b32.xlu0 %v613, 64
      %v1323 = vpop.permute.xlu0 %1322
      %1324 = vrot.lane.b32.xlu0 %v614, 64
      %v1325 = vpop.permute.xlu0 %1324
      %v1326 = vadd.f32 %v1096, %v1311
      %v1327 = vadd.f32 %v1097, %v1313
      %v1328 = vadd.f32 %v1098, %v1315
      %v1329 = vadd.f32 %v1099, %v1317
      %v1330 = vadd.f32 %v1100, %v1319
      %v1331 = vadd.f32 %v1101, %v1321
      %v1332 = vadd.f32 %v1102, %v1323
      %v1333 = vadd.f32 %v1103, %v1325
      %v1334 = vpack.c.bf16 %v1327, %v1326
      %v1335 = vpack.c.bf16 %v1329, %v1328
      %v1336 = vpack.c.bf16 %v1331, %v1330
      %v1337 = vpack.c.bf16 %v1333, %v1332
      %v1342 = vunpack.c.l.b16 %v1334
      %v1343 = vunpack.c.h.b16 %v1334
      %v1344 = vunpack.c.l.b16 %v1335
      %v1345 = vunpack.c.h.b16 %v1335
      %v1346 = vunpack.c.l.b16 %v1336
      %v1347 = vunpack.c.h.b16 %v1336
      %v1348 = vunpack.c.l.b16 %v1337
      %v1349 = vunpack.c.h.b16 %v1337
      %v1350 = vpack.c.b16 %v1342, %v1342
      %v1351 = vpack.c.b16 %v1343, %v1343
      %v1352 = vpack.c.b16 %v1344, %v1344
      %v1353 = vpack.c.b16 %v1345, %v1345
      %v1354 = vpack.c.b16 %v1346, %v1346
      %v1355 = vpack.c.b16 %v1347, %v1347
      %v1356 = vpack.c.b16 %v1348, %v1348
      %v1357 = vpack.c.b16 %v1349, %v1349
      %1366 = vst [vmem:[%s419] sm:$0xf] %v1350
      %1367 = vst [vmem:[%s419 + $0x4] sm:$0xf] %v1351
      %1368 = vst [vmem:[%s419 + $0x8] sm:$0xf] %v1352
      %1369 = vst [vmem:[%s419 + $0xc] sm:$0xf] %v1353
      %1370 = vst [vmem:[%s419 + $0x10] sm:$0xf] %v1354
      %1371 = vst [vmem:[%s419 + $0x14] sm:$0xf] %v1355
      %1372 = vst [vmem:[%s419 + $0x18] sm:$0xf] %v1356
      %1373 = vst [vmem:[%s419 + $0x1c] sm:$0xf] %v1357
      %p1374 = scmp.lt.s32.totalorder %s24, 1
      %s1375 = scalar_select %p1374, %s24, 1
      %s1376 = smul.addr %s1375, 8
      %s1377 = smul.addr %s1376, 4
      %s1378 = scalar_lea.vmem %s11, %s1377
      %p1379 = scmp.lt.s32.totalorder %s24, 1
      %s1380 = scalar_select %p1379, %s24, 1
      %s1381 = scalar_lea.vmem %s12, %s1380
      // Predicated region
      $region65: #{enetv2_forward.2} parent=63 // pred_check
        %p1382 = pneg %p278
      $region66: #{enetv2_forward.2} parent=63 // pred_check_branch
        %1384 = sbr.rel (%p1382) target = $region68
      $region67: #{enetv2_forward.2} parent=63 // pred_region
        _
      $region68: #{enetv2_forward.2} parent=63 // pred_fallthru
        _
      // Predicated region
      $region69: #{enetv2_forward.2} parent=63 // pred_check
        %p1385 = pneg %p304
      $region70: #{enetv2_forward.2} parent=63 // pred_check_branch
        %1387 = sbr.rel (%p1385) target = $region72
      $region71: #{enetv2_forward.2} parent=63 // pred_region
        _
      $region72: #{enetv2_forward.2} parent=63 // pred_fallthru
        _
    $region64: #{enetv2_forward.2} parent=5 // pred_fallthru
      _
    %p1388 = scmp.le.s32.totalorder 2, %s19
    // Predicated region
    $region73: #{enetv2_forward.2} parent=5 // pred_check
      %p1389 = pneg %p1388
    $region74: #{enetv2_forward.2} parent=5 // pred_check_branch
      %1391 = sbr.rel (%p1389) target = $region76
    $region75: #{enetv2_forward.2} parent=5 // pred_region
      %s1392 = ssub.s32 %s19, 2
      // Predicated region
      $region77: #{enetv2_forward.2} parent=75 // pred_check
        %p1393 = pneg %p284
      $region78: #{enetv2_forward.2} parent=75 // pred_check_branch
        %1395 = sbr.rel (%p1393) target = $region80
      $region79: #{enetv2_forward.2} parent=75 // pred_region
        %p1396 = scmp.lt.s32.totalorder %s25, 1
        %s1397 = scalar_select %p1396, %s25, 1
        %s1398 = smul.addr %s1397, 8
        %s1399 = smul.addr %s1398, 4
        %s1400 = scalar_lea.vmem %s11, %s1399
      $region80: #{enetv2_forward.2} parent=75 // pred_fallthru
        _
      // Predicated region
      $region81: #{enetv2_forward.2} parent=75 // pred_check
        %p1401 = pneg %p310
      $region82: #{enetv2_forward.2} parent=75 // pred_check_branch
        %1403 = sbr.rel (%p1401) target = $region84
      $region83: #{enetv2_forward.2} parent=75 // pred_region
        %p1404 = scmp.lt.s32.totalorder %s25, 1
        %s1405 = scalar_select %p1404, %s25, 1
        %s1406 = scalar_lea.vmem %s12, %s1405
      $region84: #{enetv2_forward.2} parent=75 // pred_fallthru
        _
    $region76: #{enetv2_forward.2} parent=5 // pred_fallthru
      _
  $region6: #{enetv2_forward.2} parent=0 // loop_footer
    %s23 = sadd.s32 1, %s19
  $region7: #{enetv2_forward.2} parent=0 // loop_footer_branch
    %18 = sbr.rel target = $region3
  $region8: #{enetv2_forward.2} parent=0 // loop_exit
    _

</llo_original>
